<compile_context>
chip_gen: v7x
topology: tpu7x:2x2x1
jax: 0.10.0
libtpu: 0.0.40
codegen_flags: <defaults>
</compile_context>

<pallas_src>
import functools

import jax
import jax.numpy as jnp
from jax import lax
from jax.experimental import pallas as pl
from jax.experimental.pallas import tpu as pltpu


def _round_up(x, m):
    return ((x + m - 1) // m) * m


def fasttext_kernel(ids_ref, emb_ref, w_ref, b_ref, out_ref, acc_ref,
                    *, num_classes, seq_len):
    """One batch tile: gather-average embeddings, FC, masked softmax."""
    bt = pl.program_id(0)
    TB, E_pad = acc_ref.shape
    C_pad = out_ref.shape[1]

    # --- embedding gather + mean over the sequence axis (AdaptiveAvgPool2d) ---
    for b in range(TB):  # static sublane-tile loop (TB == 8)
        def body(s, acc):
            tok = ids_ref[bt * TB + b, s]                 # SMEM scalar read
            return acc + emb_ref[pl.ds(tok, 1), :]        # dynamic row gather
        row = lax.fori_loop(0, seq_len, body,
                            jnp.zeros((1, E_pad), jnp.float32),
                            unroll=True)
        acc_ref[pl.ds(b, 1), :] = row

    avg = acc_ref[...] * (1.0 / seq_len)                  # (TB, E_pad)

    # --- fc layer: avg @ W (W pre-transposed to (E_pad, C_pad) on host) ---
    logits = jnp.dot(avg, w_ref[...],
                     preferred_element_type=jnp.float32)  # (TB, C_pad)
    logits = logits + b_ref[...]                          # (1, C_pad) bcast

    # Mask padded classes so they contribute nothing to the softmax.
    col = lax.broadcasted_iota(jnp.int32, (TB, C_pad), 1)
    logits = jnp.where(col < num_classes, logits, -1e30)

    # --- softmax over the class axis ---
    m = jnp.max(logits, axis=1, keepdims=True)
    e = jnp.exp(logits - m)
    denom = jnp.sum(e, axis=1, keepdims=True)
    out_ref[...] = e * pl.reciprocal(denom, approx=True)


def fasttext_forward(x_ids, emb_table, fc_w, fc_b, *, batch_tile=8):
    B, S = x_ids.shape
    V, E = emb_table.shape
    C = fc_w.shape[0]

    E_pad = _round_up(E, 128)
    C_pad = _round_up(C, 128)
    B_pad = _round_up(B, batch_tile)

    # Host-side padding / pre-transpose (done once, outside the kernel).
    ids_p = jnp.zeros((B_pad, S), jnp.int32).at[:B, :].set(x_ids)
    emb_p = jnp.zeros((V, E_pad), jnp.float32).at[:, :E].set(emb_table)
    w_t = jnp.zeros((E_pad, C_pad), jnp.float32).at[:E, :C].set(fc_w.T)
    b_p = jnp.zeros((1, C_pad), jnp.float32).at[0, :C].set(fc_b)

    kernel = functools.partial(fasttext_kernel, num_classes=C, seq_len=S)

    out_p = pl.pallas_call(
        kernel,
        out_shape=jax.ShapeDtypeStruct((B_pad, C_pad), jnp.float32),
        grid_spec=pltpu.PrefetchScalarGridSpec(
            num_scalar_prefetch=1,                 # ids -> SMEM
            grid=(B_pad // batch_tile,),
            in_specs=[
                pl.BlockSpec((V, E_pad), lambda i, ids: (0, 0)),
                pl.BlockSpec((E_pad, C_pad), lambda i, ids: (0, 0)),
                pl.BlockSpec((1, C_pad), lambda i, ids: (0, 0)),
            ],
            out_specs=pl.BlockSpec((batch_tile, C_pad), lambda i, ids: (i, 0)),
            scratch_shapes=[pltpu.VMEM((batch_tile, E_pad), jnp.float32)],
        ),
        compiler_params=pltpu.CompilerParams(
            dimension_semantics=("parallel",)),
    )(ids_p, emb_p, w_t, b_p)

    # TODO(synk): for realistic vocab sizes, keep emb_table in HBM
    # (memory_space=pl.ANY) and stream gathered rows with make_async_copy
    # instead of a single full-table VMEM block (v7x VMEM is 64 MiB).
    return out_p[:B, :C]


def fasttext_reference(x_ids, emb_table, fc_w, fc_b):
    embed = emb_table[x_ids]                 # (B, S, E)
    avg = jnp.mean(embed, axis=1)            # (B, E)
    logits = avg @ fc_w.T + fc_b             # (B, C)
    return jax.nn.softmax(logits, axis=1)


if __name__ == "__main__":
    # Small, forward-consistent shapes.
    B, S = 2, 8            # batch, sequence length
    V, E, C = 32, 32, 8    # vocab_size, embedding_dim, class_nums

    key = jax.random.PRNGKey(0)
    k_ids, k_emb, k_w, k_b = jax.random.split(key, 4)

    x_ids = jax.random.randint(k_ids, (B, S), 0, V, dtype=jnp.int32)
    # nn.Embedding: N(0, 1) init
    emb_table = jax.random.normal(k_emb, (V, E), dtype=jnp.float32)
    # nn.Linear: U(-1/sqrt(E), 1/sqrt(E)) init
    bound = 1.0 / (E ** 0.5)
    fc_w = jax.random.uniform(k_w, (C, E), jnp.float32, -bound, bound)
    fc_b = jax.random.uniform(k_b, (C,), jnp.float32, -bound, bound)

    out = fasttext_forward(x_ids, emb_table, fc_w, fc_b)
    out = jax.block_until_ready(out)

    ref = fasttext_reference(x_ids, emb_table, fc_w, fc_b)
    assert out.shape == (B, C)
    # Tolerance covers the approx (EUP) reciprocal in the softmax epilogue.
    assert jnp.allclose(out, ref, atol=1e-3, rtol=1e-3), "mismatch vs reference"

    print("KERNEL_OK")
</pallas_src>

<mosaic_0001>
module attributes {stable_mosaic.version = 11 : i64} {
  func.func @fasttext_kernel(%arg0: i32, %arg1: memref<8x8xi32, #tpu.memory_space<smem>>, %arg2: memref<32x128xf32, #tpu.memory_space<vmem>>, %arg3: memref<128x128xf32, #tpu.memory_space<vmem>>, %arg4: memref<1x128xf32, #tpu.memory_space<vmem>>, %arg5: memref<8x128xf32, #tpu.memory_space<vmem>>, %arg6: memref<8x128xf32, #tpu.memory_space<vmem>>) attributes {dimension_semantics = [#tpu.dimension_semantics<parallel>], iteration_bounds = array<i64: 1>, scalar_prefetch = 1 : i64, scratch_operands = 1 : i64, tpu.core_type = #tpu.core_type<tc>, window_params = [{pipeline_mode = #tpu.pipeline_mode<synchronous>, transform_indices = @transform_0, window_bounds = array<i64: 32, 128>}, {pipeline_mode = #tpu.pipeline_mode<synchronous>, transform_indices = @transform_1, window_bounds = array<i64: 128, 128>}, {pipeline_mode = #tpu.pipeline_mode<synchronous>, transform_indices = @transform_2, window_bounds = array<i64: 1, 128>}, {transform_indices = @transform_3, window_bounds = array<i64: 8, 128>}]} {
    %cst = arith.constant 0.000000e+00 : f32
    %0 = vector.broadcast %cst : f32 to vector<1x128xf32>
    %c0_i32 = arith.constant 0 : i32
    %c8_i32 = arith.constant 8 : i32
    %1 = arith.muli %arg0, %c8_i32 : i32
    %c0_i32_0 = arith.constant 0 : i32
    %2 = arith.addi %1, %c0_i32_0 : i32
    %3 = arith.index_cast %2 : i32 to index
    %4 = arith.index_cast %c0_i32 : i32 to index
    %5 = memref.load %arg1[%3, %4] : memref<8x8xi32, #tpu.memory_space<smem>>
    %6 = arith.index_cast %5 : i32 to index
    %c0 = arith.constant 0 : index
    %7 = vector.load %arg2[%6, %c0] : memref<32x128xf32, #tpu.memory_space<vmem>>, vector<1x128xf32>
    %8 = arith.addf %0, %7 : vector<1x128xf32>
    %c1_i32 = arith.constant 1 : i32
    %c8_i32_1 = arith.constant 8 : i32
    %9 = arith.muli %arg0, %c8_i32_1 : i32
    %c0_i32_2 = arith.constant 0 : i32
    %10 = arith.addi %9, %c0_i32_2 : i32
    %11 = arith.index_cast %10 : i32 to index
    %12 = arith.index_cast %c1_i32 : i32 to index
    %13 = memref.load %arg1[%11, %12] : memref<8x8xi32, #tpu.memory_space<smem>>
    %14 = arith.index_cast %13 : i32 to index
    %c0_3 = arith.constant 0 : index
    %15 = vector.load %arg2[%14, %c0_3] : memref<32x128xf32, #tpu.memory_space<vmem>>, vector<1x128xf32>
    %16 = arith.addf %8, %15 : vector<1x128xf32>
    %c2_i32 = arith.constant 2 : i32
    %c8_i32_4 = arith.constant 8 : i32
    %17 = arith.muli %arg0, %c8_i32_4 : i32
    %c0_i32_5 = arith.constant 0 : i32
    %18 = arith.addi %17, %c0_i32_5 : i32
    %19 = arith.index_cast %18 : i32 to index
    %20 = arith.index_cast %c2_i32 : i32 to index
    %21 = memref.load %arg1[%19, %20] : memref<8x8xi32, #tpu.memory_space<smem>>
    %22 = arith.index_cast %21 : i32 to index
    %c0_6 = arith.constant 0 : index
    %23 = vector.load %arg2[%22, %c0_6] : memref<32x128xf32, #tpu.memory_space<vmem>>, vector<1x128xf32>
    %24 = arith.addf %16, %23 : vector<1x128xf32>
    %c3_i32 = arith.constant 3 : i32
    %c8_i32_7 = arith.constant 8 : i32
    %25 = arith.muli %arg0, %c8_i32_7 : i32
    %c0_i32_8 = arith.constant 0 : i32
    %26 = arith.addi %25, %c0_i32_8 : i32
    %27 = arith.index_cast %26 : i32 to index
    %28 = arith.index_cast %c3_i32 : i32 to index
    %29 = memref.load %arg1[%27, %28] : memref<8x8xi32, #tpu.memory_space<smem>>
    %30 = arith.index_cast %29 : i32 to index
    %c0_9 = arith.constant 0 : index
    %31 = vector.load %arg2[%30, %c0_9] : memref<32x128xf32, #tpu.memory_space<vmem>>, vector<1x128xf32>
    %32 = arith.addf %24, %31 : vector<1x128xf32>
    %c4_i32 = arith.constant 4 : i32
    %c8_i32_10 = arith.constant 8 : i32
    %33 = arith.muli %arg0, %c8_i32_10 : i32
    %c0_i32_11 = arith.constant 0 : i32
    %34 = arith.addi %33, %c0_i32_11 : i32
    %35 = arith.index_cast %34 : i32 to index
    %36 = arith.index_cast %c4_i32 : i32 to index
    %37 = memref.load %arg1[%35, %36] : memref<8x8xi32, #tpu.memory_space<smem>>
    %38 = arith.index_cast %37 : i32 to index
    %c0_12 = arith.constant 0 : index
    %39 = vector.load %arg2[%38, %c0_12] : memref<32x128xf32, #tpu.memory_space<vmem>>, vector<1x128xf32>
    %40 = arith.addf %32, %39 : vector<1x128xf32>
    %c5_i32 = arith.constant 5 : i32
    %c8_i32_13 = arith.constant 8 : i32
    %41 = arith.muli %arg0, %c8_i32_13 : i32
    %c0_i32_14 = arith.constant 0 : i32
    %42 = arith.addi %41, %c0_i32_14 : i32
    %43 = arith.index_cast %42 : i32 to index
    %44 = arith.index_cast %c5_i32 : i32 to index
    %45 = memref.load %arg1[%43, %44] : memref<8x8xi32, #tpu.memory_space<smem>>
    %46 = arith.index_cast %45 : i32 to index
    %c0_15 = arith.constant 0 : index
    %47 = vector.load %arg2[%46, %c0_15] : memref<32x128xf32, #tpu.memory_space<vmem>>, vector<1x128xf32>
    %48 = arith.addf %40, %47 : vector<1x128xf32>
    %c6_i32 = arith.constant 6 : i32
    %c8_i32_16 = arith.constant 8 : i32
    %49 = arith.muli %arg0, %c8_i32_16 : i32
    %c0_i32_17 = arith.constant 0 : i32
    %50 = arith.addi %49, %c0_i32_17 : i32
    %51 = arith.index_cast %50 : i32 to index
    %52 = arith.index_cast %c6_i32 : i32 to index
    %53 = memref.load %arg1[%51, %52] : memref<8x8xi32, #tpu.memory_space<smem>>
    %54 = arith.index_cast %53 : i32 to index
    %c0_18 = arith.constant 0 : index
    %55 = vector.load %arg2[%54, %c0_18] : memref<32x128xf32, #tpu.memory_space<vmem>>, vector<1x128xf32>
    %56 = arith.addf %48, %55 : vector<1x128xf32>
    %c7_i32 = arith.constant 7 : i32
    %c8_i32_19 = arith.constant 8 : i32
    %57 = arith.muli %arg0, %c8_i32_19 : i32
    %c0_i32_20 = arith.constant 0 : i32
    %58 = arith.addi %57, %c0_i32_20 : i32
    %59 = arith.index_cast %58 : i32 to index
    %60 = arith.index_cast %c7_i32 : i32 to index
    %61 = memref.load %arg1[%59, %60] : memref<8x8xi32, #tpu.memory_space<smem>>
    %62 = arith.index_cast %61 : i32 to index
    %c0_21 = arith.constant 0 : index
    %63 = vector.load %arg2[%62, %c0_21] : memref<32x128xf32, #tpu.memory_space<vmem>>, vector<1x128xf32>
    %64 = arith.addf %56, %63 : vector<1x128xf32>
    %c8_i32_22 = arith.constant 8 : i32
    %c0_23 = arith.constant 0 : index
    %c0_24 = arith.constant 0 : index
    %65 = vector.load %arg6[%c0_23, %c0_24] : memref<8x128xf32, #tpu.memory_space<vmem>>, vector<1x128xf32>
    tpu.vector_store %arg6[%c0_23, %c0_24], %64 {strides = array<i32>} : memref<8x128xf32, #tpu.memory_space<vmem>>, vector<1x128xf32>,
    %cst_25 = arith.constant 0.000000e+00 : f32
    %66 = vector.broadcast %cst_25 : f32 to vector<1x128xf32>
    %c0_i32_26 = arith.constant 0 : i32
    %c8_i32_27 = arith.constant 8 : i32
    %67 = arith.muli %arg0, %c8_i32_27 : i32
    %c1_i32_28 = arith.constant 1 : i32
    %68 = arith.addi %67, %c1_i32_28 : i32
    %69 = arith.index_cast %68 : i32 to index
    %70 = arith.index_cast %c0_i32_26 : i32 to index
    %71 = memref.load %arg1[%69, %70] : memref<8x8xi32, #tpu.memory_space<smem>>
    %72 = arith.index_cast %71 : i32 to index
    %c0_29 = arith.constant 0 : index
    %73 = vector.load %arg2[%72, %c0_29] : memref<32x128xf32, #tpu.memory_space<vmem>>, vector<1x128xf32>
    %74 = arith.addf %66, %73 : vector<1x128xf32>
    %c1_i32_30 = arith.constant 1 : i32
    %c8_i32_31 = arith.constant 8 : i32
    %75 = arith.muli %arg0, %c8_i32_31 : i32
    %c1_i32_32 = arith.constant 1 : i32
    %76 = arith.addi %75, %c1_i32_32 : i32
    %77 = arith.index_cast %76 : i32 to index
    %78 = arith.index_cast %c1_i32_30 : i32 to index
    %79 = memref.load %arg1[%77, %78] : memref<8x8xi32, #tpu.memory_space<smem>>
    %80 = arith.index_cast %79 : i32 to index
    %c0_33 = arith.constant 0 : index
    %81 = vector.load %arg2[%80, %c0_33] : memref<32x128xf32, #tpu.memory_space<vmem>>, vector<1x128xf32>
    %82 = arith.addf %74, %81 : vector<1x128xf32>
    %c2_i32_34 = arith.constant 2 : i32
    %c8_i32_35 = arith.constant 8 : i32
    %83 = arith.muli %arg0, %c8_i32_35 : i32
    %c1_i32_36 = arith.constant 1 : i32
    %84 = arith.addi %83, %c1_i32_36 : i32
    %85 = arith.index_cast %84 : i32 to index
    %86 = arith.index_cast %c2_i32_34 : i32 to index
    %87 = memref.load %arg1[%85, %86] : memref<8x8xi32, #tpu.memory_space<smem>>
    %88 = arith.index_cast %87 : i32 to index
    %c0_37 = arith.constant 0 : index
    %89 = vector.load %arg2[%88, %c0_37] : memref<32x128xf32, #tpu.memory_space<vmem>>, vector<1x128xf32>
    %90 = arith.addf %82, %89 : vector<1x128xf32>
    %c3_i32_38 = arith.constant 3 : i32
    %c8_i32_39 = arith.constant 8 : i32
    %91 = arith.muli %arg0, %c8_i32_39 : i32
    %c1_i32_40 = arith.constant 1 : i32
    %92 = arith.addi %91, %c1_i32_40 : i32
    %93 = arith.index_cast %92 : i32 to index
    %94 = arith.index_cast %c3_i32_38 : i32 to index
    %95 = memref.load %arg1[%93, %94] : memref<8x8xi32, #tpu.memory_space<smem>>
    %96 = arith.index_cast %95 : i32 to index
    %c0_41 = arith.constant 0 : index
    %97 = vector.load %arg2[%96, %c0_41] : memref<32x128xf32, #tpu.memory_space<vmem>>, vector<1x128xf32>
    %98 = arith.addf %90, %97 : vector<1x128xf32>
    %c4_i32_42 = arith.constant 4 : i32
    %c8_i32_43 = arith.constant 8 : i32
    %99 = arith.muli %arg0, %c8_i32_43 : i32
    %c1_i32_44 = arith.constant 1 : i32
    %100 = arith.addi %99, %c1_i32_44 : i32
    %101 = arith.index_cast %100 : i32 to index
    %102 = arith.index_cast %c4_i32_42 : i32 to index
    %103 = memref.load %arg1[%101, %102] : memref<8x8xi32, #tpu.memory_space<smem>>
    %104 = arith.index_cast %103 : i32 to index
    %c0_45 = arith.constant 0 : index
    %105 = vector.load %arg2[%104, %c0_45] : memref<32x128xf32, #tpu.memory_space<vmem>>, vector<1x128xf32>
    %106 = arith.addf %98, %105 : vector<1x128xf32>
    %c5_i32_46 = arith.constant 5 : i32
    %c8_i32_47 = arith.constant 8 : i32
    %107 = arith.muli %arg0, %c8_i32_47 : i32
    %c1_i32_48 = arith.constant 1 : i32
    %108 = arith.addi %107, %c1_i32_48 : i32
    %109 = arith.index_cast %108 : i32 to index
    %110 = arith.index_cast %c5_i32_46 : i32 to index
    %111 = memref.load %arg1[%109, %110] : memref<8x8xi32, #tpu.memory_space<smem>>
    %112 = arith.index_cast %111 : i32 to index
    %c0_49 = arith.constant 0 : index
    %113 = vector.load %arg2[%112, %c0_49] : memref<32x128xf32, #tpu.memory_space<vmem>>, vector<1x128xf32>
    %114 = arith.addf %106, %113 : vector<1x128xf32>
    %c6_i32_50 = arith.constant 6 : i32
    %c8_i32_51 = arith.constant 8 : i32
    %115 = arith.muli %arg0, %c8_i32_51 : i32
    %c1_i32_52 = arith.constant 1 : i32
    %116 = arith.addi %115, %c1_i32_52 : i32
    %117 = arith.index_cast %116 : i32 to index
    %118 = arith.index_cast %c6_i32_50 : i32 to index
    %119 = memref.load %arg1[%117, %118] : memref<8x8xi32, #tpu.memory_space<smem>>
    %120 = arith.index_cast %119 : i32 to index
    %c0_53 = arith.constant 0 : index
    %121 = vector.load %arg2[%120, %c0_53] : memref<32x128xf32, #tpu.memory_space<vmem>>, vector<1x128xf32>
    %122 = arith.addf %114, %121 : vector<1x128xf32>
    %c7_i32_54 = arith.constant 7 : i32
    %c8_i32_55 = arith.constant 8 : i32
    %123 = arith.muli %arg0, %c8_i32_55 : i32
    %c1_i32_56 = arith.constant 1 : i32
    %124 = arith.addi %123, %c1_i32_56 : i32
    %125 = arith.index_cast %124 : i32 to index
    %126 = arith.index_cast %c7_i32_54 : i32 to index
    %127 = memref.load %arg1[%125, %126] : memref<8x8xi32, #tpu.memory_space<smem>>
    %128 = arith.index_cast %127 : i32 to index
    %c0_57 = arith.constant 0 : index
    %129 = vector.load %arg2[%128, %c0_57] : memref<32x128xf32, #tpu.memory_space<vmem>>, vector<1x128xf32>
    %130 = arith.addf %122, %129 : vector<1x128xf32>
    %c8_i32_58 = arith.constant 8 : i32
    %c1 = arith.constant 1 : index
    %c0_59 = arith.constant 0 : index
    %131 = vector.load %arg6[%c1, %c0_59] : memref<8x128xf32, #tpu.memory_space<vmem>>, vector<1x128xf32>
    tpu.vector_store %arg6[%c1, %c0_59], %130 {strides = array<i32>} : memref<8x128xf32, #tpu.memory_space<vmem>>, vector<1x128xf32>,
    %cst_60 = arith.constant 0.000000e+00 : f32
    %132 = vector.broadcast %cst_60 : f32 to vector<1x128xf32>
    %c0_i32_61 = arith.constant 0 : i32
    %c8_i32_62 = arith.constant 8 : i32
    %133 = arith.muli %arg0, %c8_i32_62 : i32
    %c2_i32_63 = arith.constant 2 : i32
    %134 = arith.addi %133, %c2_i32_63 : i32
    %135 = arith.index_cast %134 : i32 to index
    %136 = arith.index_cast %c0_i32_61 : i32 to index
    %137 = memref.load %arg1[%135, %136] : memref<8x8xi32, #tpu.memory_space<smem>>
    %138 = arith.index_cast %137 : i32 to index
    %c0_64 = arith.constant 0 : index
    %139 = vector.load %arg2[%138, %c0_64] : memref<32x128xf32, #tpu.memory_space<vmem>>, vector<1x128xf32>
    %140 = arith.addf %132, %139 : vector<1x128xf32>
    %c1_i32_65 = arith.constant 1 : i32
    %c8_i32_66 = arith.constant 8 : i32
    %141 = arith.muli %arg0, %c8_i32_66 : i32
    %c2_i32_67 = arith.constant 2 : i32
    %142 = arith.addi %141, %c2_i32_67 : i32
    %143 = arith.index_cast %142 : i32 to index
    %144 = arith.index_cast %c1_i32_65 : i32 to index
    %145 = memref.load %arg1[%143, %144] : memref<8x8xi32, #tpu.memory_space<smem>>
    %146 = arith.index_cast %145 : i32 to index
    %c0_68 = arith.constant 0 : index
    %147 = vector.load %arg2[%146, %c0_68] : memref<32x128xf32, #tpu.memory_space<vmem>>, vector<1x128xf32>
    %148 = arith.addf %140, %147 : vector<1x128xf32>
    %c2_i32_69 = arith.constant 2 : i32
    %c8_i32_70 = arith.constant 8 : i32
    %149 = arith.muli %arg0, %c8_i32_70 : i32
    %c2_i32_71 = arith.constant 2 : i32
    %150 = arith.addi %149, %c2_i32_71 : i32
    %151 = arith.index_cast %150 : i32 to index
    %152 = arith.index_cast %c2_i32_69 : i32 to index
    %153 = memref.load %arg1[%151, %152] : memref<8x8xi32, #tpu.memory_space<smem>>
    %154 = arith.index_cast %153 : i32 to index
    %c0_72 = arith.constant 0 : index
    %155 = vector.load %arg2[%154, %c0_72] : memref<32x128xf32, #tpu.memory_space<vmem>>, vector<1x128xf32>
    %156 = arith.addf %148, %155 : vector<1x128xf32>
    %c3_i32_73 = arith.constant 3 : i32
    %c8_i32_74 = arith.constant 8 : i32
    %157 = arith.muli %arg0, %c8_i32_74 : i32
    %c2_i32_75 = arith.constant 2 : i32
    %158 = arith.addi %157, %c2_i32_75 : i32
    %159 = arith.index_cast %158 : i32 to index
    %160 = arith.index_cast %c3_i32_73 : i32 to index
    %161 = memref.load %arg1[%159, %160] : memref<8x8xi32, #tpu.memory_space<smem>>
    %162 = arith.index_cast %161 : i32 to index
    %c0_76 = arith.constant 0 : index
    %163 = vector.load %arg2[%162, %c0_76] : memref<32x128xf32, #tpu.memory_space<vmem>>, vector<1x128xf32>
    %164 = arith.addf %156, %163 : vector<1x128xf32>
    %c4_i32_77 = arith.constant 4 : i32
    %c8_i32_78 = arith.constant 8 : i32
    %165 = arith.muli %arg0, %c8_i32_78 : i32
    %c2_i32_79 = arith.constant 2 : i32
    %166 = arith.addi %165, %c2_i32_79 : i32
    %167 = arith.index_cast %166 : i32 to index
    %168 = arith.index_cast %c4_i32_77 : i32 to index
    %169 = memref.load %arg1[%167, %168] : memref<8x8xi32, #tpu.memory_space<smem>>
    %170 = arith.index_cast %169 : i32 to index
    %c0_80 = arith.constant 0 : index
    %171 = vector.load %arg2[%170, %c0_80] : memref<32x128xf32, #tpu.memory_space<vmem>>, vector<1x128xf32>
    %172 = arith.addf %164, %171 : vector<1x128xf32>
    %c5_i32_81 = arith.constant 5 : i32
    %c8_i32_82 = arith.constant 8 : i32
    %173 = arith.muli %arg0, %c8_i32_82 : i32
    %c2_i32_83 = arith.constant 2 : i32
    %174 = arith.addi %173, %c2_i32_83 : i32
    %175 = arith.index_cast %174 : i32 to index
    %176 = arith.index_cast %c5_i32_81 : i32 to index
    %177 = memref.load %arg1[%175, %176] : memref<8x8xi32, #tpu.memory_space<smem>>
    %178 = arith.index_cast %177 : i32 to index
    %c0_84 = arith.constant 0 : index
    %179 = vector.load %arg2[%178, %c0_84] : memref<32x128xf32, #tpu.memory_space<vmem>>, vector<1x128xf32>
    %180 = arith.addf %172, %179 : vector<1x128xf32>
    %c6_i32_85 = arith.constant 6 : i32
    %c8_i32_86 = arith.constant 8 : i32
    %181 = arith.muli %arg0, %c8_i32_86 : i32
    %c2_i32_87 = arith.constant 2 : i32
    %182 = arith.addi %181, %c2_i32_87 : i32
    %183 = arith.index_cast %182 : i32 to index
    %184 = arith.index_cast %c6_i32_85 : i32 to index
    %185 = memref.load %arg1[%183, %184] : memref<8x8xi32, #tpu.memory_space<smem>>
    %186 = arith.index_cast %185 : i32 to index
    %c0_88 = arith.constant 0 : index
    %187 = vector.load %arg2[%186, %c0_88] : memref<32x128xf32, #tpu.memory_space<vmem>>, vector<1x128xf32>
    %188 = arith.addf %180, %187 : vector<1x128xf32>
    %c7_i32_89 = arith.constant 7 : i32
    %c8_i32_90 = arith.constant 8 : i32
    %189 = arith.muli %arg0, %c8_i32_90 : i32
    %c2_i32_91 = arith.constant 2 : i32
    %190 = arith.addi %189, %c2_i32_91 : i32
    %191 = arith.index_cast %190 : i32 to index
    %192 = arith.index_cast %c7_i32_89 : i32 to index
    %193 = memref.load %arg1[%191, %192] : memref<8x8xi32, #tpu.memory_space<smem>>
    %194 = arith.index_cast %193 : i32 to index
    %c0_92 = arith.constant 0 : index
    %195 = vector.load %arg2[%194, %c0_92] : memref<32x128xf32, #tpu.memory_space<vmem>>, vector<1x128xf32>
    %196 = arith.addf %188, %195 : vector<1x128xf32>
    %c8_i32_93 = arith.constant 8 : i32
    %c2 = arith.constant 2 : index
    %c0_94 = arith.constant 0 : index
    %197 = vector.load %arg6[%c2, %c0_94] : memref<8x128xf32, #tpu.memory_space<vmem>>, vector<1x128xf32>
    tpu.vector_store %arg6[%c2, %c0_94], %196 {strides = array<i32>} : memref<8x128xf32, #tpu.memory_space<vmem>>, vector<1x128xf32>,
    %cst_95 = arith.constant 0.000000e+00 : f32
    %198 = vector.broadcast %cst_95 : f32 to vector<1x128xf32>
    %c0_i32_96 = arith.constant 0 : i32
    %c8_i32_97 = arith.constant 8 : i32
    %199 = arith.muli %arg0, %c8_i32_97 : i32
    %c3_i32_98 = arith.constant 3 : i32
    %200 = arith.addi %199, %c3_i32_98 : i32
    %201 = arith.index_cast %200 : i32 to index
    %202 = arith.index_cast %c0_i32_96 : i32 to index
    %203 = memref.load %arg1[%201, %202] : memref<8x8xi32, #tpu.memory_space<smem>>
    %204 = arith.index_cast %203 : i32 to index
    %c0_99 = arith.constant 0 : index
    %205 = vector.load %arg2[%204, %c0_99] : memref<32x128xf32, #tpu.memory_space<vmem>>, vector<1x128xf32>
    %206 = arith.addf %198, %205 : vector<1x128xf32>
    %c1_i32_100 = arith.constant 1 : i32
    %c8_i32_101 = arith.constant 8 : i32
    %207 = arith.muli %arg0, %c8_i32_101 : i32
    %c3_i32_102 = arith.constant 3 : i32
    %208 = arith.addi %207, %c3_i32_102 : i32
    %209 = arith.index_cast %208 : i32 to index
    %210 = arith.index_cast %c1_i32_100 : i32 to index
    %211 = memref.load %arg1[%209, %210] : memref<8x8xi32, #tpu.memory_space<smem>>
    %212 = arith.index_cast %211 : i32 to index
    %c0_103 = arith.constant 0 : index
    %213 = vector.load %arg2[%212, %c0_103] : memref<32x128xf32, #tpu.memory_space<vmem>>, vector<1x128xf32>
    %214 = arith.addf %206, %213 : vector<1x128xf32>
    %c2_i32_104 = arith.constant 2 : i32
    %c8_i32_105 = arith.constant 8 : i32
    %215 = arith.muli %arg0, %c8_i32_105 : i32
    %c3_i32_106 = arith.constant 3 : i32
    %216 = arith.addi %215, %c3_i32_106 : i32
    %217 = arith.index_cast %216 : i32 to index
    %218 = arith.index_cast %c2_i32_104 : i32 to index
    %219 = memref.load %arg1[%217, %218] : memref<8x8xi32, #tpu.memory_space<smem>>
    %220 = arith.index_cast %219 : i32 to index
    %c0_107 = arith.constant 0 : index
    %221 = vector.load %arg2[%220, %c0_107] : memref<32x128xf32, #tpu.memory_space<vmem>>, vector<1x128xf32>
    %222 = arith.addf %214, %221 : vector<1x128xf32>
    %c3_i32_108 = arith.constant 3 : i32
    %c8_i32_109 = arith.constant 8 : i32
    %223 = arith.muli %arg0, %c8_i32_109 : i32
    %c3_i32_110 = arith.constant 3 : i32
    %224 = arith.addi %223, %c3_i32_110 : i32
    %225 = arith.index_cast %224 : i32 to index
    %226 = arith.index_cast %c3_i32_108 : i32 to index
    %227 = memref.load %arg1[%225, %226] : memref<8x8xi32, #tpu.memory_space<smem>>
    %228 = arith.index_cast %227 : i32 to index
    %c0_111 = arith.constant 0 : index
    %229 = vector.load %arg2[%228, %c0_111] : memref<32x128xf32, #tpu.memory_space<vmem>>, vector<1x128xf32>
    %230 = arith.addf %222, %229 : vector<1x128xf32>
    %c4_i32_112 = arith.constant 4 : i32
    %c8_i32_113 = arith.constant 8 : i32
    %231 = arith.muli %arg0, %c8_i32_113 : i32
    %c3_i32_114 = arith.constant 3 : i32
    %232 = arith.addi %231, %c3_i32_114 : i32
    %233 = arith.index_cast %232 : i32 to index
    %234 = arith.index_cast %c4_i32_112 : i32 to index
    %235 = memref.load %arg1[%233, %234] : memref<8x8xi32, #tpu.memory_space<smem>>
    %236 = arith.index_cast %235 : i32 to index
    %c0_115 = arith.constant 0 : index
    %237 = vector.load %arg2[%236, %c0_115] : memref<32x128xf32, #tpu.memory_space<vmem>>, vector<1x128xf32>
    %238 = arith.addf %230, %237 : vector<1x128xf32>
    %c5_i32_116 = arith.constant 5 : i32
    %c8_i32_117 = arith.constant 8 : i32
    %239 = arith.muli %arg0, %c8_i32_117 : i32
    %c3_i32_118 = arith.constant 3 : i32
    %240 = arith.addi %239, %c3_i32_118 : i32
    %241 = arith.index_cast %240 : i32 to index
    %242 = arith.index_cast %c5_i32_116 : i32 to index
    %243 = memref.load %arg1[%241, %242] : memref<8x8xi32, #tpu.memory_space<smem>>
    %244 = arith.index_cast %243 : i32 to index
    %c0_119 = arith.constant 0 : index
    %245 = vector.load %arg2[%244, %c0_119] : memref<32x128xf32, #tpu.memory_space<vmem>>, vector<1x128xf32>
    %246 = arith.addf %238, %245 : vector<1x128xf32>
    %c6_i32_120 = arith.constant 6 : i32
    %c8_i32_121 = arith.constant 8 : i32
    %247 = arith.muli %arg0, %c8_i32_121 : i32
    %c3_i32_122 = arith.constant 3 : i32
    %248 = arith.addi %247, %c3_i32_122 : i32
    %249 = arith.index_cast %248 : i32 to index
    %250 = arith.index_cast %c6_i32_120 : i32 to index
    %251 = memref.load %arg1[%249, %250] : memref<8x8xi32, #tpu.memory_space<smem>>
    %252 = arith.index_cast %251 : i32 to index
    %c0_123 = arith.constant 0 : index
    %253 = vector.load %arg2[%252, %c0_123] : memref<32x128xf32, #tpu.memory_space<vmem>>, vector<1x128xf32>
    %254 = arith.addf %246, %253 : vector<1x128xf32>
    %c7_i32_124 = arith.constant 7 : i32
    %c8_i32_125 = arith.constant 8 : i32
    %255 = arith.muli %arg0, %c8_i32_125 : i32
    %c3_i32_126 = arith.constant 3 : i32
    %256 = arith.addi %255, %c3_i32_126 : i32
    %257 = arith.index_cast %256 : i32 to index
    %258 = arith.index_cast %c7_i32_124 : i32 to index
    %259 = memref.load %arg1[%257, %258] : memref<8x8xi32, #tpu.memory_space<smem>>
    %260 = arith.index_cast %259 : i32 to index
    %c0_127 = arith.constant 0 : index
    %261 = vector.load %arg2[%260, %c0_127] : memref<32x128xf32, #tpu.memory_space<vmem>>, vector<1x128xf32>
    %262 = arith.addf %254, %261 : vector<1x128xf32>
    %c8_i32_128 = arith.constant 8 : i32
    %c3 = arith.constant 3 : index
    %c0_129 = arith.constant 0 : index
    %263 = vector.load %arg6[%c3, %c0_129] : memref<8x128xf32, #tpu.memory_space<vmem>>, vector<1x128xf32>
    tpu.vector_store %arg6[%c3, %c0_129], %262 {strides = array<i32>} : memref<8x128xf32, #tpu.memory_space<vmem>>, vector<1x128xf32>,
    %cst_130 = arith.constant 0.000000e+00 : f32
    %264 = vector.broadcast %cst_130 : f32 to vector<1x128xf32>
    %c0_i32_131 = arith.constant 0 : i32
    %c8_i32_132 = arith.constant 8 : i32
    %265 = arith.muli %arg0, %c8_i32_132 : i32
    %c4_i32_133 = arith.constant 4 : i32
    %266 = arith.addi %265, %c4_i32_133 : i32
    %267 = arith.index_cast %266 : i32 to index
    %268 = arith.index_cast %c0_i32_131 : i32 to index
    %269 = memref.load %arg1[%267, %268] : memref<8x8xi32, #tpu.memory_space<smem>>
    %270 = arith.index_cast %269 : i32 to index
    %c0_134 = arith.constant 0 : index
    %271 = vector.load %arg2[%270, %c0_134] : memref<32x128xf32, #tpu.memory_space<vmem>>, vector<1x128xf32>
    %272 = arith.addf %264, %271 : vector<1x128xf32>
    %c1_i32_135 = arith.constant 1 : i32
    %c8_i32_136 = arith.constant 8 : i32
    %273 = arith.muli %arg0, %c8_i32_136 : i32
    %c4_i32_137 = arith.constant 4 : i32
    %274 = arith.addi %273, %c4_i32_137 : i32
    %275 = arith.index_cast %274 : i32 to index
    %276 = arith.index_cast %c1_i32_135 : i32 to index
    %277 = memref.load %arg1[%275, %276] : memref<8x8xi32, #tpu.memory_space<smem>>
    %278 = arith.index_cast %277 : i32 to index
    %c0_138 = arith.constant 0 : index
    %279 = vector.load %arg2[%278, %c0_138] : memref<32x128xf32, #tpu.memory_space<vmem>>, vector<1x128xf32>
    %280 = arith.addf %272, %279 : vector<1x128xf32>
    %c2_i32_139 = arith.constant 2 : i32
    %c8_i32_140 = arith.constant 8 : i32
    %281 = arith.muli %arg0, %c8_i32_140 : i32
    %c4_i32_141 = arith.constant 4 : i32
    %282 = arith.addi %281, %c4_i32_141 : i32
    %283 = arith.index_cast %282 : i32 to index
    %284 = arith.index_cast %c2_i32_139 : i32 to index
    %285 = memref.load %arg1[%283, %284] : memref<8x8xi32, #tpu.memory_space<smem>>
    %286 = arith.index_cast %285 : i32 to index
    %c0_142 = arith.constant 0 : index
    %287 = vector.load %arg2[%286, %c0_142] : memref<32x128xf32, #tpu.memory_space<vmem>>, vector<1x128xf32>
    %288 = arith.addf %280, %287 : vector<1x128xf32>
    %c3_i32_143 = arith.constant 3 : i32
    %c8_i32_144 = arith.constant 8 : i32
    %289 = arith.muli %arg0, %c8_i32_144 : i32
    %c4_i32_145 = arith.constant 4 : i32
    %290 = arith.addi %289, %c4_i32_145 : i32
    %291 = arith.index_cast %290 : i32 to index
    %292 = arith.index_cast %c3_i32_143 : i32 to index
    %293 = memref.load %arg1[%291, %292] : memref<8x8xi32, #tpu.memory_space<smem>>
    %294 = arith.index_cast %293 : i32 to index
    %c0_146 = arith.constant 0 : index
    %295 = vector.load %arg2[%294, %c0_146] : memref<32x128xf32, #tpu.memory_space<vmem>>, vector<1x128xf32>
    %296 = arith.addf %288, %295 : vector<1x128xf32>
    %c4_i32_147 = arith.constant 4 : i32
    %c8_i32_148 = arith.constant 8 : i32
    %297 = arith.muli %arg0, %c8_i32_148 : i32
    %c4_i32_149 = arith.constant 4 : i32
    %298 = arith.addi %297, %c4_i32_149 : i32
    %299 = arith.index_cast %298 : i32 to index
    %300 = arith.index_cast %c4_i32_147 : i32 to index
    %301 = memref.load %arg1[%299, %300] : memref<8x8xi32, #tpu.memory_space<smem>>
    %302 = arith.index_cast %301 : i32 to index
    %c0_150 = arith.constant 0 : index
    %303 = vector.load %arg2[%302, %c0_150] : memref<32x128xf32, #tpu.memory_space<vmem>>, vector<1x128xf32>
    %304 = arith.addf %296, %303 : vector<1x128xf32>
    %c5_i32_151 = arith.constant 5 : i32
    %c8_i32_152 = arith.constant 8 : i32
    %305 = arith.muli %arg0, %c8_i32_152 : i32
    %c4_i32_153 = arith.constant 4 : i32
    %306 = arith.addi %305, %c4_i32_153 : i32
    %307 = arith.index_cast %306 : i32 to index
    %308 = arith.index_cast %c5_i32_151 : i32 to index
    %309 = memref.load %arg1[%307, %308] : memref<8x8xi32, #tpu.memory_space<smem>>
    %310 = arith.index_cast %309 : i32 to index
    %c0_154 = arith.constant 0 : index
    %311 = vector.load %arg2[%310, %c0_154] : memref<32x128xf32, #tpu.memory_space<vmem>>, vector<1x128xf32>
    %312 = arith.addf %304, %311 : vector<1x128xf32>
    %c6_i32_155 = arith.constant 6 : i32
    %c8_i32_156 = arith.constant 8 : i32
    %313 = arith.muli %arg0, %c8_i32_156 : i32
    %c4_i32_157 = arith.constant 4 : i32
    %314 = arith.addi %313, %c4_i32_157 : i32
    %315 = arith.index_cast %314 : i32 to index
    %316 = arith.index_cast %c6_i32_155 : i32 to index
    %317 = memref.load %arg1[%315, %316] : memref<8x8xi32, #tpu.memory_space<smem>>
    %318 = arith.index_cast %317 : i32 to index
    %c0_158 = arith.constant 0 : index
    %319 = vector.load %arg2[%318, %c0_158] : memref<32x128xf32, #tpu.memory_space<vmem>>, vector<1x128xf32>
    %320 = arith.addf %312, %319 : vector<1x128xf32>
    %c7_i32_159 = arith.constant 7 : i32
    %c8_i32_160 = arith.constant 8 : i32
    %321 = arith.muli %arg0, %c8_i32_160 : i32
    %c4_i32_161 = arith.constant 4 : i32
    %322 = arith.addi %321, %c4_i32_161 : i32
    %323 = arith.index_cast %322 : i32 to index
    %324 = arith.index_cast %c7_i32_159 : i32 to index
    %325 = memref.load %arg1[%323, %324] : memref<8x8xi32, #tpu.memory_space<smem>>
    %326 = arith.index_cast %325 : i32 to index
    %c0_162 = arith.constant 0 : index
    %327 = vector.load %arg2[%326, %c0_162] : memref<32x128xf32, #tpu.memory_space<vmem>>, vector<1x128xf32>
    %328 = arith.addf %320, %327 : vector<1x128xf32>
    %c8_i32_163 = arith.constant 8 : i32
    %c4 = arith.constant 4 : index
    %c0_164 = arith.constant 0 : index
    %329 = vector.load %arg6[%c4, %c0_164] : memref<8x128xf32, #tpu.memory_space<vmem>>, vector<1x128xf32>
    tpu.vector_store %arg6[%c4, %c0_164], %328 {strides = array<i32>} : memref<8x128xf32, #tpu.memory_space<vmem>>, vector<1x128xf32>,
    %cst_165 = arith.constant 0.000000e+00 : f32
    %330 = vector.broadcast %cst_165 : f32 to vector<1x128xf32>
    %c0_i32_166 = arith.constant 0 : i32
    %c8_i32_167 = arith.constant 8 : i32
    %331 = arith.muli %arg0, %c8_i32_167 : i32
    %c5_i32_168 = arith.constant 5 : i32
    %332 = arith.addi %331, %c5_i32_168 : i32
    %333 = arith.index_cast %332 : i32 to index
    %334 = arith.index_cast %c0_i32_166 : i32 to index
    %335 = memref.load %arg1[%333, %334] : memref<8x8xi32, #tpu.memory_space<smem>>
    %336 = arith.index_cast %335 : i32 to index
    %c0_169 = arith.constant 0 : index
    %337 = vector.load %arg2[%336, %c0_169] : memref<32x128xf32, #tpu.memory_space<vmem>>, vector<1x128xf32>
    %338 = arith.addf %330, %337 : vector<1x128xf32>
    %c1_i32_170 = arith.constant 1 : i32
    %c8_i32_171 = arith.constant 8 : i32
    %339 = arith.muli %arg0, %c8_i32_171 : i32
    %c5_i32_172 = arith.constant 5 : i32
    %340 = arith.addi %339, %c5_i32_172 : i32
    %341 = arith.index_cast %340 : i32 to index
    %342 = arith.index_cast %c1_i32_170 : i32 to index
    %343 = memref.load %arg1[%341, %342] : memref<8x8xi32, #tpu.memory_space<smem>>
    %344 = arith.index_cast %343 : i32 to index
    %c0_173 = arith.constant 0 : index
    %345 = vector.load %arg2[%344, %c0_173] : memref<32x128xf32, #tpu.memory_space<vmem>>, vector<1x128xf32>
    %346 = arith.addf %338, %345 : vector<1x128xf32>
    %c2_i32_174 = arith.constant 2 : i32
    %c8_i32_175 = arith.constant 8 : i32
    %347 = arith.muli %arg0, %c8_i32_175 : i32
    %c5_i32_176 = arith.constant 5 : i32
    %348 = arith.addi %347, %c5_i32_176 : i32
    %349 = arith.index_cast %348 : i32 to index
    %350 = arith.index_cast %c2_i32_174 : i32 to index
    %351 = memref.load %arg1[%349, %350] : memref<8x8xi32, #tpu.memory_space<smem>>
    %352 = arith.index_cast %351 : i32 to index
    %c0_177 = arith.constant 0 : index
    %353 = vector.load %arg2[%352, %c0_177] : memref<32x128xf32, #tpu.memory_space<vmem>>, vector<1x128xf32>
    %354 = arith.addf %346, %353 : vector<1x128xf32>
    %c3_i32_178 = arith.constant 3 : i32
    %c8_i32_179 = arith.constant 8 : i32
    %355 = arith.muli %arg0, %c8_i32_179 : i32
    %c5_i32_180 = arith.constant 5 : i32
    %356 = arith.addi %355, %c5_i32_180 : i32
    %357 = arith.index_cast %356 : i32 to index
    %358 = arith.index_cast %c3_i32_178 : i32 to index
    %359 = memref.load %arg1[%357, %358] : memref<8x8xi32, #tpu.memory_space<smem>>
    %360 = arith.index_cast %359 : i32 to index
    %c0_181 = arith.constant 0 : index
    %361 = vector.load %arg2[%360, %c0_181] : memref<32x128xf32, #tpu.memory_space<vmem>>, vector<1x128xf32>
    %362 = arith.addf %354, %361 : vector<1x128xf32>
    %c4_i32_182 = arith.constant 4 : i32
    %c8_i32_183 = arith.constant 8 : i32
    %363 = arith.muli %arg0, %c8_i32_183 : i32
    %c5_i32_184 = arith.constant 5 : i32
    %364 = arith.addi %363, %c5_i32_184 : i32
    %365 = arith.index_cast %364 : i32 to index
    %366 = arith.index_cast %c4_i32_182 : i32 to index
    %367 = memref.load %arg1[%365, %366] : memref<8x8xi32, #tpu.memory_space<smem>>
    %368 = arith.index_cast %367 : i32 to index
    %c0_185 = arith.constant 0 : index
    %369 = vector.load %arg2[%368, %c0_185] : memref<32x128xf32, #tpu.memory_space<vmem>>, vector<1x128xf32>
    %370 = arith.addf %362, %369 : vector<1x128xf32>
    %c5_i32_186 = arith.constant 5 : i32
    %c8_i32_187 = arith.constant 8 : i32
    %371 = arith.muli %arg0, %c8_i32_187 : i32
    %c5_i32_188 = arith.constant 5 : i32
    %372 = arith.addi %371, %c5_i32_188 : i32
    %373 = arith.index_cast %372 : i32 to index
    %374 = arith.index_cast %c5_i32_186 : i32 to index
    %375 = memref.load %arg1[%373, %374] : memref<8x8xi32, #tpu.memory_space<smem>>
    %376 = arith.index_cast %375 : i32 to index
    %c0_189 = arith.constant 0 : index
    %377 = vector.load %arg2[%376, %c0_189] : memref<32x128xf32, #tpu.memory_space<vmem>>, vector<1x128xf32>
    %378 = arith.addf %370, %377 : vector<1x128xf32>
    %c6_i32_190 = arith.constant 6 : i32
    %c8_i32_191 = arith.constant 8 : i32
    %379 = arith.muli %arg0, %c8_i32_191 : i32
    %c5_i32_192 = arith.constant 5 : i32
    %380 = arith.addi %379, %c5_i32_192 : i32
    %381 = arith.index_cast %380 : i32 to index
    %382 = arith.index_cast %c6_i32_190 : i32 to index
    %383 = memref.load %arg1[%381, %382] : memref<8x8xi32, #tpu.memory_space<smem>>
    %384 = arith.index_cast %383 : i32 to index
    %c0_193 = arith.constant 0 : index
    %385 = vector.load %arg2[%384, %c0_193] : memref<32x128xf32, #tpu.memory_space<vmem>>, vector<1x128xf32>
    %386 = arith.addf %378, %385 : vector<1x128xf32>
    %c7_i32_194 = arith.constant 7 : i32
    %c8_i32_195 = arith.constant 8 : i32
    %387 = arith.muli %arg0, %c8_i32_195 : i32
    %c5_i32_196 = arith.constant 5 : i32
    %388 = arith.addi %387, %c5_i32_196 : i32
    %389 = arith.index_cast %388 : i32 to index
    %390 = arith.index_cast %c7_i32_194 : i32 to index
    %391 = memref.load %arg1[%389, %390] : memref<8x8xi32, #tpu.memory_space<smem>>
    %392 = arith.index_cast %391 : i32 to index
    %c0_197 = arith.constant 0 : index
    %393 = vector.load %arg2[%392, %c0_197] : memref<32x128xf32, #tpu.memory_space<vmem>>, vector<1x128xf32>
    %394 = arith.addf %386, %393 : vector<1x128xf32>
    %c8_i32_198 = arith.constant 8 : i32
    %c5 = arith.constant 5 : index
    %c0_199 = arith.constant 0 : index
    %395 = vector.load %arg6[%c5, %c0_199] : memref<8x128xf32, #tpu.memory_space<vmem>>, vector<1x128xf32>
    tpu.vector_store %arg6[%c5, %c0_199], %394 {strides = array<i32>} : memref<8x128xf32, #tpu.memory_space<vmem>>, vector<1x128xf32>,
    %cst_200 = arith.constant 0.000000e+00 : f32
    %396 = vector.broadcast %cst_200 : f32 to vector<1x128xf32>
    %c0_i32_201 = arith.constant 0 : i32
    %c8_i32_202 = arith.constant 8 : i32
    %397 = arith.muli %arg0, %c8_i32_202 : i32
    %c6_i32_203 = arith.constant 6 : i32
    %398 = arith.addi %397, %c6_i32_203 : i32
    %399 = arith.index_cast %398 : i32 to index
    %400 = arith.index_cast %c0_i32_201 : i32 to index
    %401 = memref.load %arg1[%399, %400] : memref<8x8xi32, #tpu.memory_space<smem>>
    %402 = arith.index_cast %401 : i32 to index
    %c0_204 = arith.constant 0 : index
    %403 = vector.load %arg2[%402, %c0_204] : memref<32x128xf32, #tpu.memory_space<vmem>>, vector<1x128xf32>
    %404 = arith.addf %396, %403 : vector<1x128xf32>
    %c1_i32_205 = arith.constant 1 : i32
    %c8_i32_206 = arith.constant 8 : i32
    %405 = arith.muli %arg0, %c8_i32_206 : i32
    %c6_i32_207 = arith.constant 6 : i32
    %406 = arith.addi %405, %c6_i32_207 : i32
    %407 = arith.index_cast %406 : i32 to index
    %408 = arith.index_cast %c1_i32_205 : i32 to index
    %409 = memref.load %arg1[%407, %408] : memref<8x8xi32, #tpu.memory_space<smem>>
    %410 = arith.index_cast %409 : i32 to index
    %c0_208 = arith.constant 0 : index
    %411 = vector.load %arg2[%410, %c0_208] : memref<32x128xf32, #tpu.memory_space<vmem>>, vector<1x128xf32>
    %412 = arith.addf %404, %411 : vector<1x128xf32>
    %c2_i32_209 = arith.constant 2 : i32
    %c8_i32_210 = arith.constant 8 : i32
    %413 = arith.muli %arg0, %c8_i32_210 : i32
    %c6_i32_211 = arith.constant 6 : i32
    %414 = arith.addi %413, %c6_i32_211 : i32
    %415 = arith.index_cast %414 : i32 to index
    %416 = arith.index_cast %c2_i32_209 : i32 to index
    %417 = memref.load %arg1[%415, %416] : memref<8x8xi32, #tpu.memory_space<smem>>
    %418 = arith.index_cast %417 : i32 to index
    %c0_212 = arith.constant 0 : index
    %419 = vector.load %arg2[%418, %c0_212] : memref<32x128xf32, #tpu.memory_space<vmem>>, vector<1x128xf32>
    %420 = arith.addf %412, %419 : vector<1x128xf32>
    %c3_i32_213 = arith.constant 3 : i32
    %c8_i32_214 = arith.constant 8 : i32
    %421 = arith.muli %arg0, %c8_i32_214 : i32
    %c6_i32_215 = arith.constant 6 : i32
    %422 = arith.addi %421, %c6_i32_215 : i32
    %423 = arith.index_cast %422 : i32 to index
    %424 = arith.index_cast %c3_i32_213 : i32 to index
    %425 = memref.load %arg1[%423, %424] : memref<8x8xi32, #tpu.memory_space<smem>>
    %426 = arith.index_cast %425 : i32 to index
    %c0_216 = arith.constant 0 : index
    %427 = vector.load %arg2[%426, %c0_216] : memref<32x128xf32, #tpu.memory_space<vmem>>, vector<1x128xf32>
    %428 = arith.addf %420, %427 : vector<1x128xf32>
    %c4_i32_217 = arith.constant 4 : i32
    %c8_i32_218 = arith.constant 8 : i32
    %429 = arith.muli %arg0, %c8_i32_218 : i32
    %c6_i32_219 = arith.constant 6 : i32
    %430 = arith.addi %429, %c6_i32_219 : i32
    %431 = arith.index_cast %430 : i32 to index
    %432 = arith.index_cast %c4_i32_217 : i32 to index
    %433 = memref.load %arg1[%431, %432] : memref<8x8xi32, #tpu.memory_space<smem>>
    %434 = arith.index_cast %433 : i32 to index
    %c0_220 = arith.constant 0 : index
    %435 = vector.load %arg2[%434, %c0_220] : memref<32x128xf32, #tpu.memory_space<vmem>>, vector<1x128xf32>
    %436 = arith.addf %428, %435 : vector<1x128xf32>
    %c5_i32_221 = arith.constant 5 : i32
    %c8_i32_222 = arith.constant 8 : i32
    %437 = arith.muli %arg0, %c8_i32_222 : i32
    %c6_i32_223 = arith.constant 6 : i32
    %438 = arith.addi %437, %c6_i32_223 : i32
    %439 = arith.index_cast %438 : i32 to index
    %440 = arith.index_cast %c5_i32_221 : i32 to index
    %441 = memref.load %arg1[%439, %440] : memref<8x8xi32, #tpu.memory_space<smem>>
    %442 = arith.index_cast %441 : i32 to index
    %c0_224 = arith.constant 0 : index
    %443 = vector.load %arg2[%442, %c0_224] : memref<32x128xf32, #tpu.memory_space<vmem>>, vector<1x128xf32>
    %444 = arith.addf %436, %443 : vector<1x128xf32>
    %c6_i32_225 = arith.constant 6 : i32
    %c8_i32_226 = arith.constant 8 : i32
    %445 = arith.muli %arg0, %c8_i32_226 : i32
    %c6_i32_227 = arith.constant 6 : i32
    %446 = arith.addi %445, %c6_i32_227 : i32
    %447 = arith.index_cast %446 : i32 to index
    %448 = arith.index_cast %c6_i32_225 : i32 to index
    %449 = memref.load %arg1[%447, %448] : memref<8x8xi32, #tpu.memory_space<smem>>
    %450 = arith.index_cast %449 : i32 to index
    %c0_228 = arith.constant 0 : index
    %451 = vector.load %arg2[%450, %c0_228] : memref<32x128xf32, #tpu.memory_space<vmem>>, vector<1x128xf32>
    %452 = arith.addf %444, %451 : vector<1x128xf32>
    %c7_i32_229 = arith.constant 7 : i32
    %c8_i32_230 = arith.constant 8 : i32
    %453 = arith.muli %arg0, %c8_i32_230 : i32
    %c6_i32_231 = arith.constant 6 : i32
    %454 = arith.addi %453, %c6_i32_231 : i32
    %455 = arith.index_cast %454 : i32 to index
    %456 = arith.index_cast %c7_i32_229 : i32 to index
    %457 = memref.load %arg1[%455, %456] : memref<8x8xi32, #tpu.memory_space<smem>>
    %458 = arith.index_cast %457 : i32 to index
    %c0_232 = arith.constant 0 : index
    %459 = vector.load %arg2[%458, %c0_232] : memref<32x128xf32, #tpu.memory_space<vmem>>, vector<1x128xf32>
    %460 = arith.addf %452, %459 : vector<1x128xf32>
    %c8_i32_233 = arith.constant 8 : i32
    %c6 = arith.constant 6 : index
    %c0_234 = arith.constant 0 : index
    %461 = vector.load %arg6[%c6, %c0_234] : memref<8x128xf32, #tpu.memory_space<vmem>>, vector<1x128xf32>
    tpu.vector_store %arg6[%c6, %c0_234], %460 {strides = array<i32>} : memref<8x128xf32, #tpu.memory_space<vmem>>, vector<1x128xf32>,
    %cst_235 = arith.constant 0.000000e+00 : f32
    %462 = vector.broadcast %cst_235 : f32 to vector<1x128xf32>
    %c0_i32_236 = arith.constant 0 : i32
    %c8_i32_237 = arith.constant 8 : i32
    %463 = arith.muli %arg0, %c8_i32_237 : i32
    %c7_i32_238 = arith.constant 7 : i32
    %464 = arith.addi %463, %c7_i32_238 : i32
    %465 = arith.index_cast %464 : i32 to index
    %466 = arith.index_cast %c0_i32_236 : i32 to index
    %467 = memref.load %arg1[%465, %466] : memref<8x8xi32, #tpu.memory_space<smem>>
    %468 = arith.index_cast %467 : i32 to index
    %c0_239 = arith.constant 0 : index
    %469 = vector.load %arg2[%468, %c0_239] : memref<32x128xf32, #tpu.memory_space<vmem>>, vector<1x128xf32>
    %470 = arith.addf %462, %469 : vector<1x128xf32>
    %c1_i32_240 = arith.constant 1 : i32
    %c8_i32_241 = arith.constant 8 : i32
    %471 = arith.muli %arg0, %c8_i32_241 : i32
    %c7_i32_242 = arith.constant 7 : i32
    %472 = arith.addi %471, %c7_i32_242 : i32
    %473 = arith.index_cast %472 : i32 to index
    %474 = arith.index_cast %c1_i32_240 : i32 to index
    %475 = memref.load %arg1[%473, %474] : memref<8x8xi32, #tpu.memory_space<smem>>
    %476 = arith.index_cast %475 : i32 to index
    %c0_243 = arith.constant 0 : index
    %477 = vector.load %arg2[%476, %c0_243] : memref<32x128xf32, #tpu.memory_space<vmem>>, vector<1x128xf32>
    %478 = arith.addf %470, %477 : vector<1x128xf32>
    %c2_i32_244 = arith.constant 2 : i32
    %c8_i32_245 = arith.constant 8 : i32
    %479 = arith.muli %arg0, %c8_i32_245 : i32
    %c7_i32_246 = arith.constant 7 : i32
    %480 = arith.addi %479, %c7_i32_246 : i32
    %481 = arith.index_cast %480 : i32 to index
    %482 = arith.index_cast %c2_i32_244 : i32 to index
    %483 = memref.load %arg1[%481, %482] : memref<8x8xi32, #tpu.memory_space<smem>>
    %484 = arith.index_cast %483 : i32 to index
    %c0_247 = arith.constant 0 : index
    %485 = vector.load %arg2[%484, %c0_247] : memref<32x128xf32, #tpu.memory_space<vmem>>, vector<1x128xf32>
    %486 = arith.addf %478, %485 : vector<1x128xf32>
    %c3_i32_248 = arith.constant 3 : i32
    %c8_i32_249 = arith.constant 8 : i32
    %487 = arith.muli %arg0, %c8_i32_249 : i32
    %c7_i32_250 = arith.constant 7 : i32
    %488 = arith.addi %487, %c7_i32_250 : i32
    %489 = arith.index_cast %488 : i32 to index
    %490 = arith.index_cast %c3_i32_248 : i32 to index
    %491 = memref.load %arg1[%489, %490] : memref<8x8xi32, #tpu.memory_space<smem>>
    %492 = arith.index_cast %491 : i32 to index
    %c0_251 = arith.constant 0 : index
    %493 = vector.load %arg2[%492, %c0_251] : memref<32x128xf32, #tpu.memory_space<vmem>>, vector<1x128xf32>
    %494 = arith.addf %486, %493 : vector<1x128xf32>
    %c4_i32_252 = arith.constant 4 : i32
    %c8_i32_253 = arith.constant 8 : i32
    %495 = arith.muli %arg0, %c8_i32_253 : i32
    %c7_i32_254 = arith.constant 7 : i32
    %496 = arith.addi %495, %c7_i32_254 : i32
    %497 = arith.index_cast %496 : i32 to index
    %498 = arith.index_cast %c4_i32_252 : i32 to index
    %499 = memref.load %arg1[%497, %498] : memref<8x8xi32, #tpu.memory_space<smem>>
    %500 = arith.index_cast %499 : i32 to index
    %c0_255 = arith.constant 0 : index
    %501 = vector.load %arg2[%500, %c0_255] : memref<32x128xf32, #tpu.memory_space<vmem>>, vector<1x128xf32>
    %502 = arith.addf %494, %501 : vector<1x128xf32>
    %c5_i32_256 = arith.constant 5 : i32
    %c8_i32_257 = arith.constant 8 : i32
    %503 = arith.muli %arg0, %c8_i32_257 : i32
    %c7_i32_258 = arith.constant 7 : i32
    %504 = arith.addi %503, %c7_i32_258 : i32
    %505 = arith.index_cast %504 : i32 to index
    %506 = arith.index_cast %c5_i32_256 : i32 to index
    %507 = memref.load %arg1[%505, %506] : memref<8x8xi32, #tpu.memory_space<smem>>
    %508 = arith.index_cast %507 : i32 to index
    %c0_259 = arith.constant 0 : index
    %509 = vector.load %arg2[%508, %c0_259] : memref<32x128xf32, #tpu.memory_space<vmem>>, vector<1x128xf32>
    %510 = arith.addf %502, %509 : vector<1x128xf32>
    %c6_i32_260 = arith.constant 6 : i32
    %c8_i32_261 = arith.constant 8 : i32
    %511 = arith.muli %arg0, %c8_i32_261 : i32
    %c7_i32_262 = arith.constant 7 : i32
    %512 = arith.addi %511, %c7_i32_262 : i32
    %513 = arith.index_cast %512 : i32 to index
    %514 = arith.index_cast %c6_i32_260 : i32 to index
    %515 = memref.load %arg1[%513, %514] : memref<8x8xi32, #tpu.memory_space<smem>>
    %516 = arith.index_cast %515 : i32 to index
    %c0_263 = arith.constant 0 : index
    %517 = vector.load %arg2[%516, %c0_263] : memref<32x128xf32, #tpu.memory_space<vmem>>, vector<1x128xf32>
    %518 = arith.addf %510, %517 : vector<1x128xf32>
    %c7_i32_264 = arith.constant 7 : i32
    %c8_i32_265 = arith.constant 8 : i32
    %519 = arith.muli %arg0, %c8_i32_265 : i32
    %c7_i32_266 = arith.constant 7 : i32
    %520 = arith.addi %519, %c7_i32_266 : i32
    %521 = arith.index_cast %520 : i32 to index
    %522 = arith.index_cast %c7_i32_264 : i32 to index
    %523 = memref.load %arg1[%521, %522] : memref<8x8xi32, #tpu.memory_space<smem>>
    %524 = arith.index_cast %523 : i32 to index
    %c0_267 = arith.constant 0 : index
    %525 = vector.load %arg2[%524, %c0_267] : memref<32x128xf32, #tpu.memory_space<vmem>>, vector<1x128xf32>
    %526 = arith.addf %518, %525 : vector<1x128xf32>
    %c8_i32_268 = arith.constant 8 : i32
    %c7 = arith.constant 7 : index
    %c0_269 = arith.constant 0 : index
    %527 = vector.load %arg6[%c7, %c0_269] : memref<8x128xf32, #tpu.memory_space<vmem>>, vector<1x128xf32>
    tpu.vector_store %arg6[%c7, %c0_269], %526 {strides = array<i32>} : memref<8x128xf32, #tpu.memory_space<vmem>>, vector<1x128xf32>,
    %c0_270 = arith.constant 0 : index
    %c0_271 = arith.constant 0 : index
    %528 = vector.load %arg6[%c0_270, %c0_271] : memref<8x128xf32, #tpu.memory_space<vmem>>, vector<8x128xf32>
    %cst_272 = arith.constant 1.250000e-01 : f32
    %529 = vector.broadcast %cst_272 : f32 to vector<8x128xf32>
    %530 = arith.mulf %528, %529 : vector<8x128xf32>
    %c0_273 = arith.constant 0 : index
    %c0_274 = arith.constant 0 : index
    %531 = vector.load %arg3[%c0_273, %c0_274] : memref<128x128xf32, #tpu.memory_space<vmem>>, vector<128x128xf32>
    %cst_275 = arith.constant dense<0.000000e+00> : vector<8x128xf32>
    %532 = tpu.matmul %530, %531, %cst_275 {dimension_numbers = #tpu.dot_dimension_numbers<[1], [0], [0], [1], [0, 0, 1, 1], [], []>} : vector<8x128xf32>, vector<128x128xf32>, vector<8x128xf32> -> vector<8x128xf32>
    %c0_276 = arith.constant 0 : index
    %c0_277 = arith.constant 0 : index
    %533 = vector.load %arg4[%c0_276, %c0_277] : memref<1x128xf32, #tpu.memory_space<vmem>>, vector<1x128xf32>
    %534 = vector.broadcast %533 : vector<1x128xf32> to vector<8x128xf32>
    %535 = arith.addf %532, %534 : vector<8x128xf32>
    %536 = tpu.iota {dimensions = array<i32: 1>} : vector<8x128xi32>
    %c8_i32_278 = arith.constant 8 : i32
    %537 = vector.broadcast %c8_i32_278 : i32 to vector<8x128xi32>
    %538 = arith.cmpi slt, %536, %537 : vector<8x128xi32>
    %cst_279 = arith.constant -1.000000e+30 : f32
    %539 = vector.broadcast %cst_279 : f32 to vector<8x128xf32>
    %540 = arith.select %538, %535, %539 : vector<8x128xi1>, vector<8x128xf32>
    %cst_280 = arith.constant dense<0xFF800000> : vector<8xf32>
    %541 = vector.multi_reduction <maximumf>, %540, %cst_280 [1] : vector<8x128xf32> to vector<8xf32>
    %542 = vector.shape_cast %541 : vector<8xf32> to vector<8x1xf32>
    %543 = vector.broadcast %542 : vector<8x1xf32> to vector<8x128xf32>
    %544 = arith.subf %540, %543 : vector<8x128xf32>
    %545 = math.exp %544 : vector<8x128xf32>
    %cst_281 = arith.constant dense<0.000000e+00> : vector<8xf32>
    %546 = vector.multi_reduction <add>, %545, %cst_281 [1] : vector<8x128xf32> to vector<8xf32>
    %547 = vector.shape_cast %546 : vector<8xf32> to vector<8x1xf32>
    %548 = tpu.reciprocal %547 {approx = true} : vector<8x1xf32> -> vector<8x1xf32>
    %549 = vector.broadcast %548 : vector<8x1xf32> to vector<8x128xf32>
    %550 = arith.mulf %545, %549 : vector<8x128xf32>
    %c0_282 = arith.constant 0 : index
    %c0_283 = arith.constant 0 : index
    %551 = vector.load %arg5[%c0_282, %c0_283] : memref<8x128xf32, #tpu.memory_space<vmem>>, vector<8x128xf32>
    tpu.vector_store %arg5[%c0_282, %c0_283], %550 {strides = array<i32>} : memref<8x128xf32, #tpu.memory_space<vmem>>, vector<8x128xf32>,
    return
  }
  func.func @transform_0(%arg0: i32, %arg1: memref<8x8xi32, #tpu.memory_space<smem>>) -> (i32, i32) {
    %c0_i32 = arith.constant 0 : i32
    %c0_i32_0 = arith.constant 0 : i32
    %c0_i32_1 = arith.constant 0 : i32
    return %c0_i32, %c0_i32_0 : i32, i32
  }
  func.func @transform_1(%arg0: i32, %arg1: memref<8x8xi32, #tpu.memory_space<smem>>) -> (i32, i32) {
    %c0_i32 = arith.constant 0 : i32
    %c0_i32_0 = arith.constant 0 : i32
    %c0_i32_1 = arith.constant 0 : i32
    return %c0_i32, %c0_i32_0 : i32, i32
  }
  func.func @transform_2(%arg0: i32, %arg1: memref<8x8xi32, #tpu.memory_space<smem>>) -> (i32, i32) {
    %c0_i32 = arith.constant 0 : i32
    %c0_i32_0 = arith.constant 0 : i32
    %c0_i32_1 = arith.constant 0 : i32
    return %c0_i32, %c0_i32_0 : i32, i32
  }
  func.func @transform_3(%arg0: i32, %arg1: memref<8x8xi32, #tpu.memory_space<smem>>) -> (i32, i32) {
    %c0_i32 = arith.constant 0 : i32
    %c0_i32_0 = arith.constant 0 : i32
    return %arg0, %c0_i32 : i32, i32
  }
}

</mosaic_0001>

<llo_original>
// kernel: tpu_custom_call.1
$region0: #{tpu_custom_call.1}
  #allocation0 [shape = 'u32[]', space=smem, size = 0x4, offset = 0x4, fixed_abs, tag = 'smem constant byte address 0x4 - core index']
  #allocation1 [shape = 'u32[144,128]{1,0:T(1,128)}', space=vmem, size = 0x12000, scoped, tag = 'internal scratch']
  #allocation2 [shape = 'f32[8,128]{1,0:T(8,128)}', space=vmem, size = 0x1000, scoped, tag = 'scratch operand']
  #allocation3 [shape = 's32[1]{0}', space=sflag, size = 0x4, scoped, tag = 'scoped memory for tpu_custom_call.1']
  #allocation4 [shape = 'u8[4096]{0}', space=smem, size = 0x1000, scoped, tag = 'prefetched SMEM operand 0']
  %s0 = inlined_call_operand.hbm [shape: s32[8,8], index: 0, kind: input, shape index: {}]
  %s1 = inlined_call_operand.hbm [shape: f32[32,128], index: 1, kind: input, shape index: {}]
  %s2 = inlined_call_operand.hbm [shape: f32[128,128], index: 2, kind: input, shape index: {}]
  %s3 = inlined_call_operand.vmem [shape: f32[1,128], index: 3, kind: input, shape index: {}]
  %s4 = inlined_call_operand.hbm [shape: f32[8,128], index: 4, kind: output, shape index: {}]
  %s5 = sld [smem:[#allocation0]]
  $region30: #{tpu_custom_call.1} parent=0
    _
  %s7 = ssub.s32 1, %s5
  %s8 = scalar_select 0, %s7, %s5
  %10 = dma.hbm_to_smem %s0, 128, [#allocation4], [#allocation3]
  %11 = dma.done [#allocation3], 128
  %12 = sfence
  $region1: #{tpu_custom_call.1} parent=0
    #allocation5 [shape = 'u8[16384]{0}', space=vmem, size = 0x4000, scoped, tag = 'input window, operand 1, single buffered']
    #allocation6 [shape = 's32[1]{0}', space=sflag, size = 0x4, scoped, tag = 'scoped memory for tpu_custom_call.1']
    #allocation7 [shape = 's32[1]{0}', space=sflag, size = 0x4, scoped, tag = 'scoped memory for tpu_custom_call.1']
    #allocation8 [shape = 'u8[65536]{0}', space=vmem, size = 0x10000, scoped, tag = 'input window, operand 2, single buffered']
    #allocation9 [shape = 's32[1]{0}', space=sflag, size = 0x4, scoped, tag = 'scoped memory for tpu_custom_call.1']
    #allocation10 [shape = 'u8[4096]{0}', space=vmem, size = 0x1000, scoped, tag = 'output window, operand 0, single buffered']
    %13 = vsyncpa [#allocation6], 0
    %14 = vsyncpa [#allocation9], 0
    %15 = vsyncpa [#allocation7], 0
    // Predicated region
    $region2: #{tpu_custom_call.1} parent=1 // pred_check
      _
    $region3: #{tpu_custom_call.1} parent=1 // pred_check_branch
      %17 = sbr.rel (0) target = $region5
    $region4: #{tpu_custom_call.1} parent=1 // pred_region
      %s19 = ssub.s32 512, 512
      %20 = vsyncadd [#allocation6], %s19
      %s21 = sshll.u32 [#allocation5], 4
      %s22 = int_to_ptr.vmem [resolvable:$true] %s21
      %27 = dma.hbm_to_vmem [thread:$0]  %s1, 512, %s22, [#allocation6], 128, 128, 8
    $region5: #{tpu_custom_call.1} parent=1 // pred_fallthru
      _
    // Predicated region
    $region6: #{tpu_custom_call.1} parent=1 // pred_check
      _
    $region7: #{tpu_custom_call.1} parent=1 // pred_check_branch
      %29 = sbr.rel (0) target = $region9
    $region8: #{tpu_custom_call.1} parent=1 // pred_region
      %s31 = ssub.s32 2048, 2048
      %32 = vsyncadd [#allocation9], %s31
      %s33 = sshll.u32 [#allocation8], 4
      %s34 = int_to_ptr.vmem [resolvable:$true] %s33
      %39 = dma.hbm_to_vmem [thread:$0]  %s2, 2048, %s34, [#allocation9], 128, 128, 8
    $region9: #{tpu_custom_call.1} parent=1 // pred_fallthru
      _
    // Predicated region
    $region10: #{tpu_custom_call.1} parent=1 // pred_check
      _
    $region11: #{tpu_custom_call.1} parent=1 // pred_check_branch
      %41 = sbr.rel (0) target = $region13
    $region12: #{tpu_custom_call.1} parent=1 // pred_region
      _
    $region13: #{tpu_custom_call.1} parent=1 // pred_fallthru
      _
    // Predicated region
    $region14: #{tpu_custom_call.1} parent=1 // pred_check
      _
    $region15: #{tpu_custom_call.1} parent=1 // pred_check_branch
      %43 = sbr.rel (0) target = $region17
    $region16: #{tpu_custom_call.1} parent=1 // pred_region
      %44 = dma.done [#allocation6], 512
    $region17: #{tpu_custom_call.1} parent=1 // pred_fallthru
      _
    // Predicated region
    $region18: #{tpu_custom_call.1} parent=1 // pred_check
      _
    $region19: #{tpu_custom_call.1} parent=1 // pred_check_branch
      %46 = sbr.rel (0) target = $region21
    $region20: #{tpu_custom_call.1} parent=1 // pred_region
      %47 = dma.done [#allocation9], 2048
    $region21: #{tpu_custom_call.1} parent=1 // pred_fallthru
      _
    %s48 = smul.u32 0, 8
    %s49 = smul.u32 %s48, 128
    %s50 = sld [smem:[#allocation4 + %s49]]
    %s51 = scalar_lea.vmem [#allocation5], %s50
    %v52 = vld [vmem:[%s51] sm:$0x1]
    %v53 = vadd.f32 %v52, 0.0
    %s54 = sadd.s32 %s49, 1
    %s55 = sld [smem:[#allocation4 + %s54]]
    %s56 = scalar_lea.vmem [#allocation5], %s55
    %v57 = vld [vmem:[%s56] sm:$0x1]
    %v58 = vadd.f32 %v53, %v57
    %s59 = sadd.s32 %s49, 2
    %s60 = sld [smem:[#allocation4 + %s59]]
    %s61 = scalar_lea.vmem [#allocation5], %s60
    %v62 = vld [vmem:[%s61] sm:$0x1]
    %v63 = vadd.f32 %v58, %v62
    %s64 = sadd.s32 %s49, 3
    %s65 = sld [smem:[#allocation4 + %s64]]
    %s66 = scalar_lea.vmem [#allocation5], %s65
    %v67 = vld [vmem:[%s66] sm:$0x1]
    %v68 = vadd.f32 %v63, %v67
    %s69 = sadd.s32 %s49, 4
    %s70 = sld [smem:[#allocation4 + %s69]]
    %s71 = scalar_lea.vmem [#allocation5], %s70
    %v72 = vld [vmem:[%s71] sm:$0x1]
    %v73 = vadd.f32 %v68, %v72
    %s74 = sadd.s32 %s49, 5
    %s75 = sld [smem:[#allocation4 + %s74]]
    %s76 = scalar_lea.vmem [#allocation5], %s75
    %v77 = vld [vmem:[%s76] sm:$0x1]
    %v78 = vadd.f32 %v73, %v77
    %s79 = sadd.s32 %s49, 6
    %s80 = sld [smem:[#allocation4 + %s79]]
    %s81 = scalar_lea.vmem [#allocation5], %s80
    %v82 = vld [vmem:[%s81] sm:$0x1]
    %v83 = vadd.f32 %v78, %v82
    %s84 = sadd.s32 %s49, 7
    %s85 = sld [smem:[#allocation4 + %s84]]
    %s86 = scalar_lea.vmem [#allocation5], %s85
    %v87 = vld [vmem:[%s86] sm:$0x1]
    %v88 = vadd.f32 %v83, %v87
    %89 = vst [vmem:[#allocation2] sm:$0x1] %v88
    %s90 = sadd.s32 %s48, 1
    %s91 = smul.u32 %s90, 128
    %s92 = sld [smem:[#allocation4 + %s91]]
    %s93 = scalar_lea.vmem [#allocation5], %s92
    %v94 = vld [vmem:[%s93] sm:$0x1]
    %v95 = vadd.f32 %v94, 0.0
    %s96 = sadd.s32 %s91, 1
    %s97 = sld [smem:[#allocation4 + %s96]]
    %s98 = scalar_lea.vmem [#allocation5], %s97
    %v99 = vld [vmem:[%s98] sm:$0x1]
    %v100 = vadd.f32 %v95, %v99
    %s101 = sadd.s32 %s91, 2
    %s102 = sld [smem:[#allocation4 + %s101]]
    %s103 = scalar_lea.vmem [#allocation5], %s102
    %v104 = vld [vmem:[%s103] sm:$0x1]
    %v105 = vadd.f32 %v100, %v104
    %s106 = sadd.s32 %s91, 3
    %s107 = sld [smem:[#allocation4 + %s106]]
    %s108 = scalar_lea.vmem [#allocation5], %s107
    %v109 = vld [vmem:[%s108] sm:$0x1]
    %v110 = vadd.f32 %v105, %v109
    %s111 = sadd.s32 %s91, 4
    %s112 = sld [smem:[#allocation4 + %s111]]
    %s113 = scalar_lea.vmem [#allocation5], %s112
    %v114 = vld [vmem:[%s113] sm:$0x1]
    %v115 = vadd.f32 %v110, %v114
    %s116 = sadd.s32 %s91, 5
    %s117 = sld [smem:[#allocation4 + %s116]]
    %s118 = scalar_lea.vmem [#allocation5], %s117
    %v119 = vld [vmem:[%s118] sm:$0x1]
    %v120 = vadd.f32 %v115, %v119
    %s121 = sadd.s32 %s91, 6
    %s122 = sld [smem:[#allocation4 + %s121]]
    %s123 = scalar_lea.vmem [#allocation5], %s122
    %v124 = vld [vmem:[%s123] sm:$0x1]
    %v125 = vadd.f32 %v120, %v124
    %s126 = sadd.s32 %s91, 7
    %s127 = sld [smem:[#allocation4 + %s126]]
    %s128 = scalar_lea.vmem [#allocation5], %s127
    %v129 = vld [vmem:[%s128] sm:$0x1]
    %v130 = vadd.f32 %v125, %v129
    %131 = vst [vmem:[#allocation2 + $0x1] sm:$0x1] %v130
    %s132 = sadd.s32 %s48, 2
    %s133 = smul.u32 %s132, 128
    %s134 = sld [smem:[#allocation4 + %s133]]
    %s135 = scalar_lea.vmem [#allocation5], %s134
    %v136 = vld [vmem:[%s135] sm:$0x1]
    %v137 = vadd.f32 %v136, 0.0
    %s138 = sadd.s32 %s133, 1
    %s139 = sld [smem:[#allocation4 + %s138]]
    %s140 = scalar_lea.vmem [#allocation5], %s139
    %v141 = vld [vmem:[%s140] sm:$0x1]
    %v142 = vadd.f32 %v137, %v141
    %s143 = sadd.s32 %s133, 2
    %s144 = sld [smem:[#allocation4 + %s143]]
    %s145 = scalar_lea.vmem [#allocation5], %s144
    %v146 = vld [vmem:[%s145] sm:$0x1]
    %v147 = vadd.f32 %v142, %v146
    %s148 = sadd.s32 %s133, 3
    %s149 = sld [smem:[#allocation4 + %s148]]
    %s150 = scalar_lea.vmem [#allocation5], %s149
    %v151 = vld [vmem:[%s150] sm:$0x1]
    %v152 = vadd.f32 %v147, %v151
    %s153 = sadd.s32 %s133, 4
    %s154 = sld [smem:[#allocation4 + %s153]]
    %s155 = scalar_lea.vmem [#allocation5], %s154
    %v156 = vld [vmem:[%s155] sm:$0x1]
    %v157 = vadd.f32 %v152, %v156
    %s158 = sadd.s32 %s133, 5
    %s159 = sld [smem:[#allocation4 + %s158]]
    %s160 = scalar_lea.vmem [#allocation5], %s159
    %v161 = vld [vmem:[%s160] sm:$0x1]
    %v162 = vadd.f32 %v157, %v161
    %s163 = sadd.s32 %s133, 6
    %s164 = sld [smem:[#allocation4 + %s163]]
    %s165 = scalar_lea.vmem [#allocation5], %s164
    %v166 = vld [vmem:[%s165] sm:$0x1]
    %v167 = vadd.f32 %v162, %v166
    %s168 = sadd.s32 %s133, 7
    %s169 = sld [smem:[#allocation4 + %s168]]
    %s170 = scalar_lea.vmem [#allocation5], %s169
    %v171 = vld [vmem:[%s170] sm:$0x1]
    %v172 = vadd.f32 %v167, %v171
    %173 = vst [vmem:[#allocation2 + $0x2] sm:$0x1] %v172
    %s174 = sadd.s32 %s48, 3
    %s175 = smul.u32 %s174, 128
    %s176 = sld [smem:[#allocation4 + %s175]]
    %s177 = scalar_lea.vmem [#allocation5], %s176
    %v178 = vld [vmem:[%s177] sm:$0x1]
    %v179 = vadd.f32 %v178, 0.0
    %s180 = sadd.s32 %s175, 1
    %s181 = sld [smem:[#allocation4 + %s180]]
    %s182 = scalar_lea.vmem [#allocation5], %s181
    %v183 = vld [vmem:[%s182] sm:$0x1]
    %v184 = vadd.f32 %v179, %v183
    %s185 = sadd.s32 %s175, 2
    %s186 = sld [smem:[#allocation4 + %s185]]
    %s187 = scalar_lea.vmem [#allocation5], %s186
    %v188 = vld [vmem:[%s187] sm:$0x1]
    %v189 = vadd.f32 %v184, %v188
    %s190 = sadd.s32 %s175, 3
    %s191 = sld [smem:[#allocation4 + %s190]]
    %s192 = scalar_lea.vmem [#allocation5], %s191
    %v193 = vld [vmem:[%s192] sm:$0x1]
    %v194 = vadd.f32 %v189, %v193
    %s195 = sadd.s32 %s175, 4
    %s196 = sld [smem:[#allocation4 + %s195]]
    %s197 = scalar_lea.vmem [#allocation5], %s196
    %v198 = vld [vmem:[%s197] sm:$0x1]
    %v199 = vadd.f32 %v194, %v198
    %s200 = sadd.s32 %s175, 5
    %s201 = sld [smem:[#allocation4 + %s200]]
    %s202 = scalar_lea.vmem [#allocation5], %s201
    %v203 = vld [vmem:[%s202] sm:$0x1]
    %v204 = vadd.f32 %v199, %v203
    %s205 = sadd.s32 %s175, 6
    %s206 = sld [smem:[#allocation4 + %s205]]
    %s207 = scalar_lea.vmem [#allocation5], %s206
    %v208 = vld [vmem:[%s207] sm:$0x1]
    %v209 = vadd.f32 %v204, %v208
    %s210 = sadd.s32 %s175, 7
    %s211 = sld [smem:[#allocation4 + %s210]]
    %s212 = scalar_lea.vmem [#allocation5], %s211
    %v213 = vld [vmem:[%s212] sm:$0x1]
    %v214 = vadd.f32 %v209, %v213
    %215 = vst [vmem:[#allocation2 + $0x3] sm:$0x1] %v214
    %s216 = sadd.s32 %s48, 4
    %s217 = smul.u32 %s216, 128
    %s218 = sld [smem:[#allocation4 + %s217]]
    %s219 = scalar_lea.vmem [#allocation5], %s218
    %v220 = vld [vmem:[%s219] sm:$0x1]
    %v221 = vadd.f32 %v220, 0.0
    %s222 = sadd.s32 %s217, 1
    %s223 = sld [smem:[#allocation4 + %s222]]
    %s224 = scalar_lea.vmem [#allocation5], %s223
    %v225 = vld [vmem:[%s224] sm:$0x1]
    %v226 = vadd.f32 %v221, %v225
    %s227 = sadd.s32 %s217, 2
    %s228 = sld [smem:[#allocation4 + %s227]]
    %s229 = scalar_lea.vmem [#allocation5], %s228
    %v230 = vld [vmem:[%s229] sm:$0x1]
    %v231 = vadd.f32 %v226, %v230
    %s232 = sadd.s32 %s217, 3
    %s233 = sld [smem:[#allocation4 + %s232]]
    %s234 = scalar_lea.vmem [#allocation5], %s233
    %v235 = vld [vmem:[%s234] sm:$0x1]
    %v236 = vadd.f32 %v231, %v235
    %s237 = sadd.s32 %s217, 4
    %s238 = sld [smem:[#allocation4 + %s237]]
    %s239 = scalar_lea.vmem [#allocation5], %s238
    %v240 = vld [vmem:[%s239] sm:$0x1]
    %v241 = vadd.f32 %v236, %v240
    %s242 = sadd.s32 %s217, 5
    %s243 = sld [smem:[#allocation4 + %s242]]
    %s244 = scalar_lea.vmem [#allocation5], %s243
    %v245 = vld [vmem:[%s244] sm:$0x1]
    %v246 = vadd.f32 %v241, %v245
    %s247 = sadd.s32 %s217, 6
    %s248 = sld [smem:[#allocation4 + %s247]]
    %s249 = scalar_lea.vmem [#allocation5], %s248
    %v250 = vld [vmem:[%s249] sm:$0x1]
    %v251 = vadd.f32 %v246, %v250
    %s252 = sadd.s32 %s217, 7
    %s253 = sld [smem:[#allocation4 + %s252]]
    %s254 = scalar_lea.vmem [#allocation5], %s253
    %v255 = vld [vmem:[%s254] sm:$0x1]
    %v256 = vadd.f32 %v251, %v255
    %257 = vst [vmem:[#allocation2 + $0x4] sm:$0x1] %v256
    %s258 = sadd.s32 %s48, 5
    %s259 = smul.u32 %s258, 128
    %s260 = sld [smem:[#allocation4 + %s259]]
    %s261 = scalar_lea.vmem [#allocation5], %s260
    %v262 = vld [vmem:[%s261] sm:$0x1]
    %v263 = vadd.f32 %v262, 0.0
    %s264 = sadd.s32 %s259, 1
    %s265 = sld [smem:[#allocation4 + %s264]]
    %s266 = scalar_lea.vmem [#allocation5], %s265
    %v267 = vld [vmem:[%s266] sm:$0x1]
    %v268 = vadd.f32 %v263, %v267
    %s269 = sadd.s32 %s259, 2
    %s270 = sld [smem:[#allocation4 + %s269]]
    %s271 = scalar_lea.vmem [#allocation5], %s270
    %v272 = vld [vmem:[%s271] sm:$0x1]
    %v273 = vadd.f32 %v268, %v272
    %s274 = sadd.s32 %s259, 3
    %s275 = sld [smem:[#allocation4 + %s274]]
    %s276 = scalar_lea.vmem [#allocation5], %s275
    %v277 = vld [vmem:[%s276] sm:$0x1]
    %v278 = vadd.f32 %v273, %v277
    %s279 = sadd.s32 %s259, 4
    %s280 = sld [smem:[#allocation4 + %s279]]
    %s281 = scalar_lea.vmem [#allocation5], %s280
    %v282 = vld [vmem:[%s281] sm:$0x1]
    %v283 = vadd.f32 %v278, %v282
    %s284 = sadd.s32 %s259, 5
    %s285 = sld [smem:[#allocation4 + %s284]]
    %s286 = scalar_lea.vmem [#allocation5], %s285
    %v287 = vld [vmem:[%s286] sm:$0x1]
    %v288 = vadd.f32 %v283, %v287
    %s289 = sadd.s32 %s259, 6
    %s290 = sld [smem:[#allocation4 + %s289]]
    %s291 = scalar_lea.vmem [#allocation5], %s290
    %v292 = vld [vmem:[%s291] sm:$0x1]
    %v293 = vadd.f32 %v288, %v292
    %s294 = sadd.s32 %s259, 7
    %s295 = sld [smem:[#allocation4 + %s294]]
    %s296 = scalar_lea.vmem [#allocation5], %s295
    %v297 = vld [vmem:[%s296] sm:$0x1]
    %v298 = vadd.f32 %v293, %v297
    %299 = vst [vmem:[#allocation2 + $0x5] sm:$0x1] %v298
    %s300 = sadd.s32 %s48, 6
    %s301 = smul.u32 %s300, 128
    %s302 = sld [smem:[#allocation4 + %s301]]
    %s303 = scalar_lea.vmem [#allocation5], %s302
    %v304 = vld [vmem:[%s303] sm:$0x1]
    %v305 = vadd.f32 %v304, 0.0
    %s306 = sadd.s32 %s301, 1
    %s307 = sld [smem:[#allocation4 + %s306]]
    %s308 = scalar_lea.vmem [#allocation5], %s307
    %v309 = vld [vmem:[%s308] sm:$0x1]
    %v310 = vadd.f32 %v305, %v309
    %s311 = sadd.s32 %s301, 2
    %s312 = sld [smem:[#allocation4 + %s311]]
    %s313 = scalar_lea.vmem [#allocation5], %s312
    %v314 = vld [vmem:[%s313] sm:$0x1]
    %v315 = vadd.f32 %v310, %v314
    %s316 = sadd.s32 %s301, 3
    %s317 = sld [smem:[#allocation4 + %s316]]
    %s318 = scalar_lea.vmem [#allocation5], %s317
    %v319 = vld [vmem:[%s318] sm:$0x1]
    %v320 = vadd.f32 %v315, %v319
    %s321 = sadd.s32 %s301, 4
    %s322 = sld [smem:[#allocation4 + %s321]]
    %s323 = scalar_lea.vmem [#allocation5], %s322
    %v324 = vld [vmem:[%s323] sm:$0x1]
    %v325 = vadd.f32 %v320, %v324
    %s326 = sadd.s32 %s301, 5
    %s327 = sld [smem:[#allocation4 + %s326]]
    %s328 = scalar_lea.vmem [#allocation5], %s327
    %v329 = vld [vmem:[%s328] sm:$0x1]
    %v330 = vadd.f32 %v325, %v329
    %s331 = sadd.s32 %s301, 6
    %s332 = sld [smem:[#allocation4 + %s331]]
    %s333 = scalar_lea.vmem [#allocation5], %s332
    %v334 = vld [vmem:[%s333] sm:$0x1]
    %v335 = vadd.f32 %v330, %v334
    %s336 = sadd.s32 %s301, 7
    %s337 = sld [smem:[#allocation4 + %s336]]
    %s338 = scalar_lea.vmem [#allocation5], %s337
    %v339 = vld [vmem:[%s338] sm:$0x1]
    %v340 = vadd.f32 %v335, %v339
    %341 = vst [vmem:[#allocation2 + $0x6] sm:$0x1] %v340
    %s342 = sadd.s32 %s48, 7
    %s343 = smul.u32 %s342, 128
    %s344 = sld [smem:[#allocation4 + %s343]]
    %s345 = scalar_lea.vmem [#allocation5], %s344
    %v346 = vld [vmem:[%s345] sm:$0x1]
    %v347 = vadd.f32 %v346, 0.0
    %s348 = sadd.s32 %s343, 1
    %s349 = sld [smem:[#allocation4 + %s348]]
    %s350 = scalar_lea.vmem [#allocation5], %s349
    %v351 = vld [vmem:[%s350] sm:$0x1]
    %v352 = vadd.f32 %v347, %v351
    %s353 = sadd.s32 %s343, 2
    %s354 = sld [smem:[#allocation4 + %s353]]
    %s355 = scalar_lea.vmem [#allocation5], %s354
    %v356 = vld [vmem:[%s355] sm:$0x1]
    %v357 = vadd.f32 %v352, %v356
    %s358 = sadd.s32 %s343, 3
    %s359 = sld [smem:[#allocation4 + %s358]]
    %s360 = scalar_lea.vmem [#allocation5], %s359
    %v361 = vld [vmem:[%s360] sm:$0x1]
    %v362 = vadd.f32 %v357, %v361
    %s363 = sadd.s32 %s343, 4
    %s364 = sld [smem:[#allocation4 + %s363]]
    %s365 = scalar_lea.vmem [#allocation5], %s364
    %v366 = vld [vmem:[%s365] sm:$0x1]
    %v367 = vadd.f32 %v362, %v366
    %s368 = sadd.s32 %s343, 5
    %s369 = sld [smem:[#allocation4 + %s368]]
    %s370 = scalar_lea.vmem [#allocation5], %s369
    %v371 = vld [vmem:[%s370] sm:$0x1]
    %v372 = vadd.f32 %v367, %v371
    %s373 = sadd.s32 %s343, 6
    %s374 = sld [smem:[#allocation4 + %s373]]
    %s375 = scalar_lea.vmem [#allocation5], %s374
    %v376 = vld [vmem:[%s375] sm:$0x1]
    %v377 = vadd.f32 %v372, %v376
    %s378 = sadd.s32 %s343, 7
    %s379 = sld [smem:[#allocation4 + %s378]]
    %s380 = scalar_lea.vmem [#allocation5], %s379
    %v381 = vld [vmem:[%s380] sm:$0x1]
    %v382 = vadd.f32 %v377, %v381
    %383 = vst [vmem:[#allocation2 + $0x7] sm:$0x1] %v382
    %v384 = vld [vmem:[#allocation2] sm:$0xff]
    %v385 = vmul.f32 %v384, 0.125
    %v386 = vld [vmem:[#allocation8] sm:$0xff]
    %v387 = vld [vmem:[#allocation8 + $0x8] sm:$0xff]
    %v388 = vld [vmem:[#allocation8 + $0x10] sm:$0xff]
    %v389 = vld [vmem:[#allocation8 + $0x18] sm:$0xff]
    %v390 = vld [vmem:[#allocation8 + $0x20] sm:$0xff]
    %v391 = vld [vmem:[#allocation8 + $0x28] sm:$0xff]
    %v392 = vld [vmem:[#allocation8 + $0x30] sm:$0xff]
    %v393 = vld [vmem:[#allocation8 + $0x38] sm:$0xff]
    %v394 = vld [vmem:[#allocation8 + $0x40] sm:$0xff]
    %v395 = vld [vmem:[#allocation8 + $0x48] sm:$0xff]
    %v396 = vld [vmem:[#allocation8 + $0x50] sm:$0xff]
    %v397 = vld [vmem:[#allocation8 + $0x58] sm:$0xff]
    %v398 = vld [vmem:[#allocation8 + $0x60] sm:$0xff]
    %v399 = vld [vmem:[#allocation8 + $0x68] sm:$0xff]
    %v400 = vld [vmem:[#allocation8 + $0x70] sm:$0xff]
    %v401 = vld [vmem:[#allocation8 + $0x78] sm:$0xff]
    %v402 = vld [vmem:[%s3] sm:$0x1]
    %v404 = vlaneseq
    %v405 = vshrl.u32 %v404, 7
    %v406 = vsub.s32 0, %v405
    %v407 = vrot.slane %v402, %v406
    %409 = vmatprep.subr.mxu0 0.0
    %410 = vmatpush1.msra.mxu0 %v386
    %411 = vmatprep.subr.mxu0 0.0
    %412 = vmatpush1.msra.mxu0 %v387
    %413 = vmatprep.subr.mxu0 0.0
    %414 = vmatpush1.msra.mxu0 %v388
    %415 = vmatprep.subr.mxu0 0.0
    %416 = vmatpush1.msra.mxu0 %v389
    %417 = vmatprep.subr.mxu0 0.0
    %418 = vmatpush1.msra.mxu0 %v390
    %419 = vmatprep.subr.mxu0 0.0
    %420 = vmatpush1.msra.mxu0 %v391
    %421 = vmatprep.subr.mxu0 0.0
    %422 = vmatpush1.msra.mxu0 %v392
    %423 = vmatprep.subr.mxu0 0.0
    %424 = vmatpush1.msra.mxu0 %v393
    %425 = vmatprep.subr.mxu0 0.0
    %426 = vmatpush1.msra.mxu0 %v394
    %427 = vmatprep.subr.mxu0 0.0
    %428 = vmatpush1.msra.mxu0 %v395
    %429 = vmatprep.subr.mxu0 0.0
    %430 = vmatpush1.msra.mxu0 %v396
    %431 = vmatprep.subr.mxu0 0.0
    %432 = vmatpush1.msra.mxu0 %v397
    %433 = vmatprep.subr.mxu0 0.0
    %434 = vmatpush1.msra.mxu0 %v398
    %435 = vmatprep.subr.mxu0 0.0
    %436 = vmatpush1.msra.mxu0 %v399
    %437 = vmatprep.subr.mxu0 0.0
    %438 = vmatpush1.msra.mxu0 %v400
    %439 = vmatprep.subr.mxu0 0.0
    %440 = vmatpush1.msra.mxu0 %v401
    %441 = vmatprep.subr.mxu0 0.0
    %442 = vmatpush1.msra.mxu0 0.0
    %443 = vmatprep.subr.mxu0 0.0
    %444 = vmatpush1.msra.mxu0 0.0
    %445 = vmatprep.subr.mxu0 0.0
    %446 = vmatpush1.msra.mxu0 0.0
    %447 = vmatprep.subr.mxu0 0.0
    %448 = vmatpush1.msra.mxu0 0.0
    %449 = vmatprep.subr.mxu0 0.0
    %450 = vmatpush1.msra.mxu0 0.0
    %451 = vmatprep.subr.mxu0 0.0
    %452 = vmatpush1.msra.mxu0 0.0
    %453 = vmatprep.subr.mxu0 0.0
    %454 = vmatpush1.msra.mxu0 0.0
    %455 = vmatprep.subr.mxu0 0.0
    %456 = vmatpush1.msra.mxu0 0.0
    %457 = vmatprep.subr.mxu0 0.0
    %458 = vmatpush1.msra.mxu0 0.0
    %459 = vmatprep.subr.mxu0 0.0
    %460 = vmatpush1.msra.mxu0 0.0
    %461 = vmatprep.subr.mxu0 0.0
    %462 = vmatpush1.msra.mxu0 0.0
    %463 = vmatprep.subr.mxu0 0.0
    %464 = vmatpush1.msra.mxu0 0.0
    %465 = vmatprep.subr.mxu0 0.0
    %466 = vmatpush1.msra.mxu0 0.0
    %467 = vmatprep.subr.mxu0 0.0
    %468 = vmatpush1.msra.mxu0 0.0
    %469 = vmatprep.subr.mxu0 0.0
    %470 = vmatpush1.msra.mxu0 0.0
    %471 = vmatprep.subr.mxu0 0.0
    %472 = vmatpush1.msra.mxu0 0.0
    %473 = vmatprep.mubr.f32.mxu0 0.0
    %474 = vmatmul.mubr.f32.gmra.mrb[0].mxu0 %v385
    %v475 = vpop.f32.mrb[0].mxu0
    %v476 = vadd.f32 %v407, %v475
    %v477 = vpop.f32.mrb[0].mxu0
    %478 = vdwg.mxu0
    %v479 = vlaneseq
    %v480 = vand.u32 %v479, 127
    %vm481 = vcmp.lt.s32.totalorder %v480, 8
    %v482 = vsel %vm481, %v476, -1e+30
    %483 = vmax.xlane.f32.xlu0 %v482
    %v484 = vpop.xlane.xlu0 %483
    %v485 = vsub.f32 %v482, %v484
    %v486 = vmul.f32 %v485, 1.442695
    %v487 = vpow.pop %v486
    %488 = vadd.xlane.f32.xlu0 %v487
    %v489 = vpop.xlane.xlu0 %488
    %v490 = vrcp.pop %v489
    %v491 = vmul.f32 %v487, %v490
    %492 = vst [vmem:[#allocation10] sm:$0xff] %v491
    // Predicated region
    $region22: #{tpu_custom_call.1} parent=1 // pred_check
      _
    $region23: #{tpu_custom_call.1} parent=1 // pred_check_branch
      %494 = sbr.rel (0) target = $region25
    $region24: #{tpu_custom_call.1} parent=1 // pred_region
      %s496 = ssub.s32 128, 128
      %497 = vsyncadd [#allocation7], %s496
      %s499 = sshll.u32 [#allocation10], 4
      %s500 = int_to_ptr.vmem [resolvable:$true] %s499
      %502 = dma.vmem_to_hbm [thread:$0]  %s500, 128, %s4, [#allocation7]
    $region25: #{tpu_custom_call.1} parent=1 // pred_fallthru
      _
    // Predicated region
    $region26: #{tpu_custom_call.1} parent=1 // pred_check
      _
    $region27: #{tpu_custom_call.1} parent=1 // pred_check_branch
      %504 = sbr.rel (0) target = $region29
    $region28: #{tpu_custom_call.1} parent=1 // pred_region
      %505 = dma.done [#allocation7], 128
    $region29: #{tpu_custom_call.1} parent=1 // pred_fallthru
      _
    %506 = vsyncpa [#allocation6], 1
    %507 = vsyncpa [#allocation9], 1
    %508 = vsyncpa [#allocation7], 1

</llo_original>
